<compile_context>
chip_gen: v6e
topology: v6e:2x2x1
jax: 0.10.0
libtpu: 0.0.40
codegen_flags: <defaults>
</compile_context>

<pallas_src>
import functools
import math

import jax
import jax.numpy as jnp
from jax.experimental import pallas as pl
from jax.experimental.pallas import tpu as pltpu


def _conv3x3_kernel(x_ref, w_ref, b_ref, o_ref, *, wp, th):
    """x_ref: (C, (TH+3)*Wp) flattened zero-padded row-slab (row-major).
       w_ref: (OC, 9*C)     weights, tap-major / channel-minor.
       b_ref: (OC, 1)       bias with `other` already folded in.
       o_ref: (OC, TH*Wp)   output rows of this slab on the padded-width grid.
    """
    lout = th * wp
    x = x_ref[...]                                        # (C, Lb)
    taps = []
    for kh in range(3):
        for kw in range(3):
            off = kh * wp + kw                            # flat shift of this tap
            taps.append(x[:, off:off + lout])             # (C, Lout)
    patches = jnp.concatenate(taps, axis=0)               # (9*C, Lout) in VMEM
    acc = jnp.dot(w_ref[...], patches,
                  preferred_element_type=jnp.float32)     # (OC, Lout) on MXU
    acc = acc + b_ref[...]                                 # bias + other (lane bcast)
    o_ref[...] = jnp.maximum(acc, 0.0).astype(o_ref.dtype)  # ReLU, lane-dense store


def _pick_row_tile(h, wp, target_elems=4096):
    """Output rows per grid step. TH*Wp must be a multiple of 128 (lane-dense
    output block) unless a single tile covers all rows."""
    th0 = 128 // math.gcd(wp, 128)
    if th0 >= h:
        return h                                   # one block: block == full dim
    target_rows = max(1, target_elems // wp)
    th = th0 * max(1, target_rows // th0)
    return h if th >= h else th


def conv_relu_forward(x, weight, bias, other=0.0):
    """x: (N, C, H, W); weight: (OC, C, 3, 3); bias: (OC,); other: scalar/(OC,).
       Returns relu(conv2d(x, weight, bias, stride=1, padding='same') + other)
       in NCHW layout."""
    x = x.astype(jnp.float32)
    n, c, h, w = x.shape
    oc, _, kh_, kw_ = weight.shape
    assert (kh_, kw_) == (3, 3)

    wp = w + 2                           # padded width
    th = _pick_row_tile(h, wp)           # output rows per grid step
    nb = -(-h // th)                     # number of row blocks
    hp = nb * th                         # rounded-up output rows
    lb = (th + 3) * wp                   # flattened slab length (incl. halo rows)
    lout = th * wp                       # output lanes per block
    k9 = 9 * c

    # ---- wrapper-side prep: one cheap pad/stack pass (no 9x im2col) --------
    xp = jnp.pad(x, ((0, 0), (0, 0), (1, hp + 2 - h), (1, 1)))   # (N,C,hp+3,wp)
    slabs = [xp[:, :, rb * th: rb * th + th + 3, :] for rb in range(nb)]
    xs = jnp.stack(slabs, axis=1).reshape(n, nb, c, lb)          # (N,NB,C,Lb)

    # weights -> (OC, 9*C), ordered (kh, kw, c) to match the tap concatenation
    w_mat = jnp.transpose(weight.astype(jnp.float32), (0, 2, 3, 1)).reshape(oc, k9)
    # Fold `other` into the bias (traced -> no recompile when `other` changes).
    # TODO(synk): a fully general tensor `other` (e.g. shape (N, OC, H, W)) would
    # need to be passed as an extra blocked kernel input instead of folded here.
    b_fold = (bias + other).astype(jnp.float32).reshape(oc, 1)

    kernel = functools.partial(_conv3x3_kernel, wp=wp, th=th)

    flops = 2 * n * nb * lout * k9 * oc
    bytes_accessed = 4 * (xs.size + w_mat.size + b_fold.size + n * oc * nb * lout)

    out_p = pl.pallas_call(
        kernel,
        out_shape=jax.ShapeDtypeStruct((n, oc, nb * lout), jnp.float32),
        grid_spec=pltpu.PrefetchScalarGridSpec(
            num_scalar_prefetch=0,
            grid=(n, nb),
            in_specs=[
                pl.BlockSpec((None, None, c, lb), lambda i, j: (i, j, 0, 0)),
                pl.BlockSpec((oc, k9), lambda i, j: (0, 0)),
                pl.BlockSpec((oc, 1), lambda i, j: (0, 0)),
            ],
            out_specs=pl.BlockSpec((None, oc, lout), lambda i, j: (i, 0, j)),
        ),
        compiler_params=pltpu.CompilerParams(
            dimension_semantics=("parallel", "parallel"),
            vmem_limit_bytes=32 * 1024 * 1024,
        ),
        cost_estimate=pl.CostEstimate(
            flops=flops, transcendentals=0, bytes_accessed=bytes_accessed),
    )(xs, w_mat, b_fold)

    # (N, OC, hp*wp) -> (N, OC, hp, wp) is metadata-only; crop pad rows/cols.
    return out_p.reshape(n, oc, hp, wp)[:, :, :h, :w]


def _reference(x, weight, bias, other):
    y = jax.lax.conv_general_dilated(
        x, weight, window_strides=(1, 1), padding="SAME",
        dimension_numbers=("NCHW", "OIHW", "NCHW"))
    y = y + bias.reshape(1, -1, 1, 1) + other
    return jnp.maximum(y, 0.0)


if __name__ == "__main__":
    key = jax.random.PRNGKey(0)
    kx1, kx2, kw, kb = jax.random.split(key, 4)

    OC, C, KH, KW = 8, 3, 3, 3
    fan_in = C * KH * KW
    bound = 1.0 / (fan_in ** 0.5)
    weight = jax.random.uniform(kw, (OC, C, KH, KW), jnp.float32, -bound, bound)
    bias = jax.random.uniform(kb, (OC,), jnp.float32, -bound, bound)

    fwd = jax.jit(conv_relu_forward)

    def check(x, other):
        out = jax.block_until_ready(fwd(x, weight, bias, other))
        ref = _reference(x, weight, bias, other)
        assert out.shape == ref.shape, (out.shape, ref.shape)
        assert jnp.allclose(out, ref, atol=2e-4, rtol=2e-4), "mismatch vs reference conv"

    # Case 1: spec-like shape (single row-block per image, grid over batch).
    x1 = jax.random.normal(kx1, (2, C, 64, 64), dtype=jnp.float32)
    check(x1, 0.5)

    # Case 2: exercises multi-row-block tiling + padded H tail.
    x2 = jax.random.normal(kx2, (1, C, 96, 40), dtype=jnp.float32)
    check(x2, 0.0)

    print("KERNEL_OK")
</pallas_src>

<mosaic_0001>
module attributes {stable_mosaic.version = 11 : i64} {
  func.func @_conv3x3_kernel(%arg0: i32, %arg1: i32, %arg2: memref<1x1x3x4422xf32, #tpu.memory_space<vmem>>, %arg3: memref<8x27xf32, #tpu.memory_space<vmem>>, %arg4: memref<8x1xf32, #tpu.memory_space<vmem>>, %arg5: memref<1x8x4224xf32, #tpu.memory_space<vmem>>) attributes {dimension_semantics = [#tpu.dimension_semantics<parallel>, #tpu.dimension_semantics<parallel>], iteration_bounds = array<i64: 2, 1>, scalar_prefetch = 0 : i64, scratch_operands = 0 : i64, tpu.core_type = #tpu.core_type<tc>, window_params = [{transform_indices = @transform_0, window_bounds = array<i64: 1, 1, 3, 4422>}, {pipeline_mode = #tpu.pipeline_mode<synchronous>, transform_indices = @transform_1, window_bounds = array<i64: 8, 27>}, {pipeline_mode = #tpu.pipeline_mode<synchronous>, transform_indices = @transform_2, window_bounds = array<i64: 8, 1>}, {transform_indices = @transform_3, window_bounds = array<i64: 1, 8, 4224>}]} {
    %c0 = arith.constant 0 : index
    %c0_0 = arith.constant 0 : index
    %c0_1 = arith.constant 0 : index
    %c0_2 = arith.constant 0 : index
    %0 = vector.load %arg2[%c0, %c0_0, %c0_1, %c0_2] : memref<1x1x3x4422xf32, #tpu.memory_space<vmem>>, vector<1x1x3x4422xf32>
    %1 = vector.shape_cast %0 : vector<1x1x3x4422xf32> to vector<3x4422xf32>
    %2 = vector.extract_strided_slice %1 {offsets = [0, 0], sizes = [3, 4224], strides = [1, 1]} : vector<3x4422xf32> to vector<3x4224xf32>
    %3 = vector.extract_strided_slice %1 {offsets = [0, 1], sizes = [3, 4224], strides = [1, 1]} : vector<3x4422xf32> to vector<3x4224xf32>
    %4 = vector.extract_strided_slice %1 {offsets = [0, 2], sizes = [3, 4224], strides = [1, 1]} : vector<3x4422xf32> to vector<3x4224xf32>
    %5 = vector.extract_strided_slice %1 {offsets = [0, 66], sizes = [3, 4224], strides = [1, 1]} : vector<3x4422xf32> to vector<3x4224xf32>
    %6 = vector.extract_strided_slice %1 {offsets = [0, 67], sizes = [3, 4224], strides = [1, 1]} : vector<3x4422xf32> to vector<3x4224xf32>
    %7 = vector.extract_strided_slice %1 {offsets = [0, 68], sizes = [3, 4224], strides = [1, 1]} : vector<3x4422xf32> to vector<3x4224xf32>
    %8 = vector.extract_strided_slice %1 {offsets = [0, 132], sizes = [3, 4224], strides = [1, 1]} : vector<3x4422xf32> to vector<3x4224xf32>
    %9 = vector.extract_strided_slice %1 {offsets = [0, 133], sizes = [3, 4224], strides = [1, 1]} : vector<3x4422xf32> to vector<3x4224xf32>
    %10 = vector.extract_strided_slice %1 {offsets = [0, 134], sizes = [3, 4224], strides = [1, 1]} : vector<3x4422xf32> to vector<3x4224xf32>
    %11 = tpu.concatenate %2, %3, %4, %5, %6, %7, %8, %9, %10 in 0 : vector<3x4224xf32>, vector<3x4224xf32>, vector<3x4224xf32>, vector<3x4224xf32>, vector<3x4224xf32>, vector<3x4224xf32>, vector<3x4224xf32>, vector<3x4224xf32>, vector<3x4224xf32> -> vector<27x4224xf32>
    %c0_3 = arith.constant 0 : index
    %c0_4 = arith.constant 0 : index
    %12 = vector.load %arg3[%c0_3, %c0_4] : memref<8x27xf32, #tpu.memory_space<vmem>>, vector<8x27xf32>
    %cst = arith.constant dense<0.000000e+00> : vector<8x4224xf32>
    %13 = tpu.matmul %12, %11, %cst {dimension_numbers = #tpu.dot_dimension_numbers<[1], [0], [0], [1], [0, 0, 1, 1], [], []>} : vector<8x27xf32>, vector<27x4224xf32>, vector<8x4224xf32> -> vector<8x4224xf32>
    %c0_5 = arith.constant 0 : index
    %c0_6 = arith.constant 0 : index
    %14 = vector.load %arg4[%c0_5, %c0_6] : memref<8x1xf32, #tpu.memory_space<vmem>>, vector<8x1xf32>
    %15 = vector.broadcast %14 : vector<8x1xf32> to vector<8x4224xf32>
    %16 = arith.addf %13, %15 : vector<8x4224xf32>
    %cst_7 = arith.constant 0.000000e+00 : f32
    %17 = vector.broadcast %cst_7 : f32 to vector<8x4224xf32>
    %18 = arith.maximumf %16, %17 : vector<8x4224xf32>
    %c0_8 = arith.constant 0 : index
    %c0_9 = arith.constant 0 : index
    %c0_10 = arith.constant 0 : index
    %19 = vector.load %arg5[%c0_8, %c0_9, %c0_10] : memref<1x8x4224xf32, #tpu.memory_space<vmem>>, vector<1x8x4224xf32>
    %20 = vector.shape_cast %19 : vector<1x8x4224xf32> to vector<8x4224xf32>
    %21 = vector.shape_cast %18 : vector<8x4224xf32> to vector<1x8x4224xf32>
    tpu.vector_store %arg5[%c0_8, %c0_9, %c0_10], %21 {strides = array<i32>} : memref<1x8x4224xf32, #tpu.memory_space<vmem>>, vector<1x8x4224xf32>,
    return
  }
  func.func @transform_0(%arg0: i32, %arg1: i32) -> (i32, i32, i32, i32) {
    %c0_i32 = arith.constant 0 : i32
    %c0_i32_0 = arith.constant 0 : i32
    %c0_i32_1 = arith.constant 0 : i32
    return %arg0, %arg1, %c0_i32, %c0_i32_0 : i32, i32, i32, i32
  }
  func.func @transform_1(%arg0: i32, %arg1: i32) -> (i32, i32) {
    %c0_i32 = arith.constant 0 : i32
    %c0_i32_0 = arith.constant 0 : i32
    %c0_i32_1 = arith.constant 0 : i32
    return %c0_i32, %c0_i32_0 : i32, i32
  }
  func.func @transform_2(%arg0: i32, %arg1: i32) -> (i32, i32) {
    %c0_i32 = arith.constant 0 : i32
    %c0_i32_0 = arith.constant 0 : i32
    %c0_i32_1 = arith.constant 0 : i32
    return %c0_i32, %c0_i32_0 : i32, i32
  }
  func.func @transform_3(%arg0: i32, %arg1: i32) -> (i32, i32, i32) {
    %c0_i32 = arith.constant 0 : i32
    %c0_i32_0 = arith.constant 0 : i32
    return %arg0, %c0_i32, %arg1 : i32, i32, i32
  }
}

</mosaic_0001>

<llo_original>
// kernel: conv_relu_forward.1
$region0: #{conv_relu_forward.1}
  #allocation0 [shape = 'u32[]', space=smem, size = 0x4, offset = 0x4, fixed_abs, tag = 'smem constant byte address 0x4 - core index']
  #allocation1 [shape = 'u32[144,128]{1,0:T(1,128)}', space=vmem, size = 0x12000, scoped, tag = 'internal scratch']
  %s0 = inlined_call_operand.vmem [shape: f32[2,1,3,4422], index: 0, kind: input, shape index: {}]
  %s1 = inlined_call_operand.vmem [shape: f32[8,27], index: 1, kind: input, shape index: {}]
  %s2 = inlined_call_operand.vmem [shape: f32[8,1], index: 2, kind: input, shape index: {}]
  %s3 = inlined_call_operand.vmem [shape: f32[2,8,4224], index: 3, kind: output, shape index: {}]
  %s4 = sld [smem:[#allocation0]]
  $region45: #{conv_relu_forward.1} parent=0
    _
  %s6 = ssub.s32 1, %s4
  %s7 = scalar_select 0, %s6, %s4
  loop: start=0, step=1, limit=4
  $region2: #{conv_relu_forward.1} parent=0 // loop_pre_header
    _
  $region3: #{conv_relu_forward.1} parent=0 // loop_header
    %s9 = sphi 0, %s13
    %p10 = scmp.ge.s32.totalorder %s9, 4
    %s16 = sphi 0, %s28
    %s17 = sphi 0, %s24
    %s18 = sphi 0, %s16
    %s19 = sphi 0, %s17
    %s20 = sphi 0, %s18
    %s21 = sphi 0, %s19
    %s33 = sphi 0, %s35
    %s36 = sphi 0, %s33
    %s37 = sphi 0, %s36
    %s53 = sphi 0, %s37
    %s57 = sphi 0, %s57
    %s59 = sphi 0, %s57
    %s60 = sphi 0, %s59
    %s74 = sphi 0, %s60
    %s78 = sphi 0, %s78
    %s80 = sphi 0, %s78
    %s81 = sphi 0, %s80
    %s95 = sphi 0, %s81
    %s103 = sphi 0, %s105
    %s106 = sphi 0, %s103
    %s107 = sphi 0, %s106
    %s123 = sphi 0, %s107
  $region4: #{conv_relu_forward.1} parent=0 // loop_header_branch
    %12 = sbr.rel (%p10) target = $region8
  $region5: #{conv_relu_forward.1} parent=0 // loop_body
    %s14 = ssub.s32 %s9, 1
    %s15 = ssub.s32 %s9, 2
    %s22 = sadd.s32 1, %s17
    %p23 = scmp.ge.s32.totalorder %s22, 1
    %s24 = scalar_select %p23, 0, %s22
    %s25 = sadd.s32 1, %s16
    %s26 = scalar_select %p23, %s25, %s16
    %p27 = scmp.ge.s32.totalorder %s26, 2
    %s28 = scalar_select %p27, 0, %s26
    %s29 = ssub.s32 %s16, %s28
    %s30 = ssub.s32 %s17, %s24
    %s31 = sor.u32 %s29, %s30
    %p32 = scmp.eq.s32.totalorder %s31, 0
    %s34 = sadd.s32 %s33, 1
    %s35 = scalar_select %p32, %s33, %s34
    %p38 = pneg %p32
    %p39 = scmp.eq.s32.totalorder %s9, 1
    %p40 = por %p38, %p39
    %p41 = scmp.ne.s32.totalorder %s33, %s36
    %p42 = scmp.eq.s32.totalorder %s9, 0
    %p43 = por %p41, %p42
    %p44 = scmp.ne.s32.totalorder %s33, %s36
    %p45 = scmp.eq.s32.totalorder %s14, 1
    %p46 = por %p44, %p45
    %p47 = scmp.ne.s32.totalorder %s36, %s37
    %p48 = scmp.eq.s32.totalorder %s14, 0
    %p49 = por %p47, %p48
    %p50 = scmp.ne.s32.totalorder %s36, %s37
    %p51 = scmp.eq.s32.totalorder %s15, 1
    %p52 = por %p50, %p51
    %p54 = scmp.ne.s32.totalorder %s37, %s53
    %p55 = scmp.eq.s32.totalorder %s15, 0
    %p56 = por %p54, %p55
    %s58 = sadd.s32 %s57, 1
    %p61 = scmp.eq.s32.totalorder %s9, 1
    %p62 = scmp.ne.s32.totalorder %s57, %s59
    %p63 = scmp.eq.s32.totalorder %s9, 0
    %p64 = por %p62, %p63
    %p65 = scmp.ne.s32.totalorder %s57, %s59
    %p66 = scmp.eq.s32.totalorder %s14, 1
    %p67 = por %p65, %p66
    %p68 = scmp.ne.s32.totalorder %s59, %s60
    %p69 = scmp.eq.s32.totalorder %s14, 0
    %p70 = por %p68, %p69
    %p71 = scmp.ne.s32.totalorder %s59, %s60
    %p72 = scmp.eq.s32.totalorder %s15, 1
    %p73 = por %p71, %p72
    %p75 = scmp.ne.s32.totalorder %s60, %s74
    %p76 = scmp.eq.s32.totalorder %s15, 0
    %p77 = por %p75, %p76
    %s79 = sadd.s32 %s78, 1
    %p82 = scmp.eq.s32.totalorder %s9, 1
    %p83 = scmp.ne.s32.totalorder %s78, %s80
    %p84 = scmp.eq.s32.totalorder %s9, 0
    %p85 = por %p83, %p84
    %p86 = scmp.ne.s32.totalorder %s78, %s80
    %p87 = scmp.eq.s32.totalorder %s14, 1
    %p88 = por %p86, %p87
    %p89 = scmp.ne.s32.totalorder %s80, %s81
    %p90 = scmp.eq.s32.totalorder %s14, 0
    %p91 = por %p89, %p90
    %p92 = scmp.ne.s32.totalorder %s80, %s81
    %p93 = scmp.eq.s32.totalorder %s15, 1
    %p94 = por %p92, %p93
    %p96 = scmp.ne.s32.totalorder %s81, %s95
    %p97 = scmp.eq.s32.totalorder %s15, 0
    %p98 = por %p96, %p97
    %s99 = ssub.s32 %s16, %s28
    %s100 = ssub.s32 %s17, %s24
    %s101 = sor.u32 %s99, %s100
    %p102 = scmp.eq.s32.totalorder %s101, 0
    %s104 = sadd.s32 %s103, 1
    %s105 = scalar_select %p102, %s103, %s104
    %p108 = pneg %p102
    %p109 = scmp.eq.s32.totalorder %s9, 1
    %p110 = por %p108, %p109
    %p111 = scmp.ne.s32.totalorder %s103, %s106
    %p112 = scmp.eq.s32.totalorder %s9, 0
    %p113 = por %p111, %p112
    %p114 = scmp.ne.s32.totalorder %s103, %s106
    %p115 = scmp.eq.s32.totalorder %s14, 1
    %p116 = por %p114, %p115
    %p117 = scmp.ne.s32.totalorder %s106, %s107
    %p118 = scmp.eq.s32.totalorder %s14, 0
    %p119 = por %p117, %p118
    %p120 = scmp.ne.s32.totalorder %s106, %s107
    %p121 = scmp.eq.s32.totalorder %s15, 1
    %p122 = por %p120, %p121
    %p124 = scmp.ne.s32.totalorder %s107, %s123
    %p125 = scmp.eq.s32.totalorder %s15, 0
    %p126 = por %p124, %p125
    %p127 = scmp.le.s32.totalorder 1, %s9
    %p128 = scmp.lt.s32.totalorder %s9, 3
    %p129 = pnand %p127, %p128
    %p130 = pneg %p129
    // Predicated region
    $region9: #{conv_relu_forward.1} parent=5 // pred_check
      _
    $region10: #{conv_relu_forward.1} parent=5 // pred_check_branch
      %132 = sbr.rel (%p129) target = $region12
    $region11: #{conv_relu_forward.1} parent=5 // pred_region
      %s133 = ssub.s32 %s9, 1
      // Predicated region
      $region13: #{conv_relu_forward.1} parent=11 // pred_check
        %p134 = pneg %p70
      $region14: #{conv_relu_forward.1} parent=11 // pred_check_branch
        %136 = sbr.rel (%p134) target = $region16
      $region15: #{conv_relu_forward.1} parent=11 // pred_region
        _
      $region16: #{conv_relu_forward.1} parent=11 // pred_fallthru
        _
      // Predicated region
      $region17: #{conv_relu_forward.1} parent=11 // pred_check
        %p137 = pneg %p91
      $region18: #{conv_relu_forward.1} parent=11 // pred_check_branch
        %139 = sbr.rel (%p137) target = $region20
      $region19: #{conv_relu_forward.1} parent=11 // pred_region
        _
      $region20: #{conv_relu_forward.1} parent=11 // pred_fallthru
        _
    $region12: #{conv_relu_forward.1} parent=5 // pred_fallthru
      _
    %p140 = scmp.lt.s32.totalorder %s9, 2
    // Predicated region
    $region21: #{conv_relu_forward.1} parent=5 // pred_check
      %p141 = pneg %p140
    $region22: #{conv_relu_forward.1} parent=5 // pred_check_branch
      %143 = sbr.rel (%p141) target = $region24
    $region23: #{conv_relu_forward.1} parent=5 // pred_region
      // Predicated region
      $region25: #{conv_relu_forward.1} parent=23 // pred_check
        %p144 = pneg %p43
      $region26: #{conv_relu_forward.1} parent=23 // pred_check_branch
        %146 = sbr.rel (%p144) target = $region28
      $region27: #{conv_relu_forward.1} parent=23 // pred_region
        %p147 = scmp.lt.s32.totalorder %s16, 1
        %s148 = scalar_select %p147, %s16, 1
        %p149 = scmp.lt.s32.totalorder %s17, 0
        %s150 = scalar_select %p149, %s17, 0
        %s151 = smul.addr %s150, 35
        %s152 = smul.addr %s148, 35
        %s153 = sadd.s32 %s151, %s152
        %s154 = smul.addr %s153, 4
        %s155 = scalar_lea.vmem %s0, %s154
      $region28: #{conv_relu_forward.1} parent=23 // pred_fallthru
        _
    $region24: #{conv_relu_forward.1} parent=5 // pred_fallthru
      _
    %p156 = scmp.le.s32.totalorder 1, %s9
    %p157 = scmp.lt.s32.totalorder %s9, 3
    %p158 = pnand %p156, %p157
    %p159 = pneg %p158
    // Predicated region
    $region29: #{conv_relu_forward.1} parent=5 // pred_check
      _
    $region30: #{conv_relu_forward.1} parent=5 // pred_check_branch
      %161 = sbr.rel (%p158) target = $region32
    $region31: #{conv_relu_forward.1} parent=5 // pred_region
      %s162 = ssub.s32 %s9, 1
      %p163 = scmp.lt.s32.totalorder %s18, 1
      %s164 = scalar_select %p163, %s18, 1
      %p165 = scmp.lt.s32.totalorder %s19, 0
      %s166 = scalar_select %p165, %s19, 0
      %s167 = smul.addr %s166, 35
      %s168 = smul.addr %s164, 35
      %s169 = sadd.s32 %s167, %s168
      %s170 = smul.addr %s169, 4
      %s171 = scalar_lea.vmem %s0, %s170
      %p172 = pneg %p49
      %p173 = pneg %p46
      %p174 = pneg %p70
      %p175 = pneg %p67
      %p176 = pneg %p91
      %p177 = pneg %p88
      %p178 = pneg %p119
      %p179 = pneg %p116
      %s180 = smul.u32 33, %s19
      %p181 = scmp.lt.s32.totalorder %s18, 1
      %s182 = scalar_select %p181, %s18, 1
      %p183 = scmp.lt.s32.totalorder %s180, 32
      %s184 = scalar_select %p183, %s180, 32
      %s185 = smul.addr %s182, 33
      %s186 = sadd.s32 %s184, %s185
      %s187 = smul.addr %s186, 8
      %s188 = scalar_lea.vmem %s3, %s187
      %p189 = scmp.lt.s32.totalorder %s18, 1
      %s190 = scalar_select %p189, %s18, 1
      %p191 = scmp.lt.s32.totalorder %s19, 0
      %s192 = scalar_select %p191, %s19, 0
      %s193 = smul.addr %s192, 35
      %s194 = smul.addr %s190, 35
      %s195 = sadd.s32 %s193, %s194
      %s196 = smul.addr %s195, 4
      %s197 = scalar_lea.vmem %s0, %s196
      %s198 = smul.u32 33, %s19
      %p199 = scmp.lt.s32.totalorder %s18, 1
      %s200 = scalar_select %p199, %s18, 1
      %p201 = scmp.lt.s32.totalorder %s198, 32
      %s202 = scalar_select %p201, %s198, 32
      %s203 = smul.addr %s200, 33
      %s204 = sadd.s32 %s202, %s203
      %s205 = smul.addr %s204, 8
      %s206 = scalar_lea.vmem %s3, %s205
      %s207 = smul.u32 33, %s19
      %v208 = vld [vmem:[%s197] sm:$0x77]
      %v209 = vld [vmem:[%s197 + $0x8] sm:$0x77]
      %v210 = vld [vmem:[%s197 + $0x10] sm:$0x77]
      %v211 = vld [vmem:[%s197 + $0x18] sm:$0x77]
      %v212 = vld [vmem:[%s197 + $0x20] sm:$0x77]
      %v213 = vld [vmem:[%s197 + $0x28] sm:$0x77]
      %v214 = vld [vmem:[%s197 + $0x30] sm:$0x77]
      %v215 = vld [vmem:[%s197 + $0x38] sm:$0x77]
      %v216 = vld [vmem:[%s197 + $0x40] sm:$0x77]
      %v217 = vld [vmem:[%s197 + $0x48] sm:$0x77]
      %v218 = vld [vmem:[%s197 + $0x50] sm:$0x77]
      %v219 = vld [vmem:[%s197 + $0x58] sm:$0x77]
      %v220 = vld [vmem:[%s197 + $0x60] sm:$0x77]
      %v221 = vld [vmem:[%s197 + $0x68] sm:$0x77]
      %v222 = vld [vmem:[%s197 + $0x70] sm:$0x77]
      %v223 = vld [vmem:[%s197 + $0x78] sm:$0x77]
      %v224 = vld [vmem:[%s197 + $0x80] sm:$0x77]
      %v225 = vld [vmem:[%s197 + $0x88] sm:$0x7]
      %v243 = vcombine.high %v208, %v208
      %v244 = vcombine.high %v209, %v209
      %v245 = vcombine.high %v210, %v210
      %v246 = vcombine.high %v211, %v211
      %v247 = vcombine.high %v212, %v212
      %v248 = vcombine.high %v213, %v213
      %v249 = vcombine.high %v214, %v214
      %v250 = vcombine.high %v215, %v215
      %v251 = vcombine.high %v216, %v216
      %v252 = vcombine.high %v217, %v217
      %v253 = vcombine.high %v218, %v218
      %v254 = vcombine.high %v219, %v219
      %v255 = vcombine.high %v220, %v220
      %v256 = vcombine.high %v221, %v221
      %v257 = vcombine.high %v222, %v222
      %v258 = vcombine.high %v223, %v223
      %v275 = vcombine.high %v224, %v224
      %v276 = vrot.slane %v208, 5
      %v277 = vrot.slane %v243, 5
      %v278 = vrot.slane %v209, 5
      %v279 = vrot.slane %v244, 5
      %v280 = vrot.slane %v210, 5
      %v281 = vrot.slane %v245, 5
      %v282 = vrot.slane %v211, 5
      %v283 = vrot.slane %v246, 5
      %v284 = vrot.slane %v212, 5
      %v285 = vrot.slane %v247, 5
      %v286 = vrot.slane %v213, 5
      %v287 = vrot.slane %v248, 5
      %v288 = vrot.slane %v214, 5
      %v289 = vrot.slane %v249, 5
      %v290 = vrot.slane %v215, 5
      %v291 = vrot.slane %v250, 5
      %v292 = vrot.slane %v216, 5
      %v293 = vrot.slane %v251, 5
      %v294 = vrot.slane %v217, 5
      %v295 = vrot.slane %v252, 5
      %v296 = vrot.slane %v218, 5
      %v297 = vrot.slane %v253, 5
      %v298 = vrot.slane %v219, 5
      %v299 = vrot.slane %v254, 5
      %v300 = vrot.slane %v220, 5
      %v301 = vrot.slane %v255, 5
      %v302 = vrot.slane %v221, 5
      %v303 = vrot.slane %v256, 5
      %v304 = vrot.slane %v222, 5
      %v305 = vrot.slane %v257, 5
      %v306 = vrot.slane %v223, 5
      %v307 = vrot.slane %v258, 5
      %v308 = vrot.slane %v224, 5
      %v309 = vrot.slane %v275, 5
      %310 = vrot.lane.b32.xlu0 %v276, 127
      %v311 = vpop.permute.xlu0 %310
      %312 = vrot.lane.b32.xlu0 %v277, 127
      %v313 = vpop.permute.xlu0 %312
      %314 = vrot.lane.b32.xlu0 %v278, 127
      %v315 = vpop.permute.xlu0 %314
      %316 = vrot.lane.b32.xlu0 %v279, 127
      %v317 = vpop.permute.xlu0 %316
      %318 = vrot.lane.b32.xlu0 %v280, 127
      %v319 = vpop.permute.xlu0 %318
      %320 = vrot.lane.b32.xlu0 %v281, 127
      %v321 = vpop.permute.xlu0 %320
      %322 = vrot.lane.b32.xlu0 %v282, 127
      %v323 = vpop.permute.xlu0 %322
      %324 = vrot.lane.b32.xlu0 %v283, 127
      %v325 = vpop.permute.xlu0 %324
      %326 = vrot.lane.b32.xlu0 %v284, 127
      %v327 = vpop.permute.xlu0 %326
      %328 = vrot.lane.b32.xlu0 %v285, 127
      %v329 = vpop.permute.xlu0 %328
      %330 = vrot.lane.b32.xlu0 %v286, 127
      %v331 = vpop.permute.xlu0 %330
      %332 = vrot.lane.b32.xlu0 %v287, 127
      %v333 = vpop.permute.xlu0 %332
      %334 = vrot.lane.b32.xlu0 %v288, 127
      %v335 = vpop.permute.xlu0 %334
      %336 = vrot.lane.b32.xlu0 %v289, 127
      %v337 = vpop.permute.xlu0 %336
      %338 = vrot.lane.b32.xlu0 %v290, 127
      %v339 = vpop.permute.xlu0 %338
      %340 = vrot.lane.b32.xlu0 %v291, 127
      %v341 = vpop.permute.xlu0 %340
      %342 = vrot.lane.b32.xlu0 %v292, 127
      %v343 = vpop.permute.xlu0 %342
      %344 = vrot.lane.b32.xlu0 %v293, 127
      %v345 = vpop.permute.xlu0 %344
      %346 = vrot.lane.b32.xlu0 %v294, 127
      %v347 = vpop.permute.xlu0 %346
      %348 = vrot.lane.b32.xlu0 %v295, 127
      %v349 = vpop.permute.xlu0 %348
      %350 = vrot.lane.b32.xlu0 %v296, 127
      %v351 = vpop.permute.xlu0 %350
      %352 = vrot.lane.b32.xlu0 %v297, 127
      %v353 = vpop.permute.xlu0 %352
      %354 = vrot.lane.b32.xlu0 %v298, 127
      %v355 = vpop.permute.xlu0 %354
      %356 = vrot.lane.b32.xlu0 %v299, 127
      %v357 = vpop.permute.xlu0 %356
      %358 = vrot.lane.b32.xlu0 %v300, 127
      %v359 = vpop.permute.xlu0 %358
      %360 = vrot.lane.b32.xlu0 %v301, 127
      %v361 = vpop.permute.xlu0 %360
      %362 = vrot.lane.b32.xlu0 %v302, 127
      %v363 = vpop.permute.xlu0 %362
      %364 = vrot.lane.b32.xlu0 %v303, 127
      %v365 = vpop.permute.xlu0 %364
      %366 = vrot.lane.b32.xlu0 %v304, 127
      %v367 = vpop.permute.xlu0 %366
      %368 = vrot.lane.b32.xlu0 %v305, 127
      %v369 = vpop.permute.xlu0 %368
      %370 = vrot.lane.b32.xlu0 %v306, 127
      %v371 = vpop.permute.xlu0 %370
      %372 = vrot.lane.b32.xlu0 %v307, 127
      %v373 = vpop.permute.xlu0 %372
      %374 = vrot.lane.b32.xlu0 %v308, 127
      %v375 = vpop.permute.xlu0 %374
      %376 = vrot.lane.b32.xlu0 %v309, 127
      %v377 = vpop.permute.xlu0 %376
      %vm378 = vcmask 1039360
      %v379 = vsel %vm378, %v311, %v313
      %v380 = vsel %vm378, %v313, %v315
      %v381 = vsel %vm378, %v315, %v317
      %v382 = vsel %vm378, %v317, %v319
      %v383 = vsel %vm378, %v319, %v321
      %v384 = vsel %vm378, %v321, %v323
      %v385 = vsel %vm378, %v323, %v325
      %v386 = vsel %vm378, %v325, %v327
      %v387 = vsel %vm378, %v327, %v329
      %v388 = vsel %vm378, %v329, %v331
      %v389 = vsel %vm378, %v331, %v333
      %v390 = vsel %vm378, %v333, %v335
      %v391 = vsel %vm378, %v335, %v337
      %v392 = vsel %vm378, %v337, %v339
      %v393 = vsel %vm378, %v339, %v341
      %v394 = vsel %vm378, %v341, %v343
      %v395 = vsel %vm378, %v343, %v345
      %v396 = vsel %vm378, %v345, %v347
      %v397 = vsel %vm378, %v347, %v349
      %v398 = vsel %vm378, %v349, %v351
      %v399 = vsel %vm378, %v351, %v353
      %v400 = vsel %vm378, %v353, %v355
      %v401 = vsel %vm378, %v355, %v357
      %v402 = vsel %vm378, %v357, %v359
      %v403 = vsel %vm378, %v359, %v361
      %v404 = vsel %vm378, %v361, %v363
      %v405 = vsel %vm378, %v363, %v365
      %v406 = vsel %vm378, %v365, %v367
      %v407 = vsel %vm378, %v367, %v369
      %v408 = vsel %vm378, %v369, %v371
      %v409 = vsel %vm378, %v371, %v373
      %v410 = vsel %vm378, %v373, %v375
      %v411 = vsel %vm378, %v375, %v377
      %v445 = vrot.slane %v208, 2
      %v446 = vrot.slane %v243, 2
      %v447 = vrot.slane %v209, 2
      %v448 = vrot.slane %v244, 2
      %v449 = vrot.slane %v210, 2
      %v450 = vrot.slane %v245, 2
      %v451 = vrot.slane %v211, 2
      %v452 = vrot.slane %v246, 2
      %v453 = vrot.slane %v212, 2
      %v454 = vrot.slane %v247, 2
      %v455 = vrot.slane %v213, 2
      %v456 = vrot.slane %v248, 2
      %v457 = vrot.slane %v214, 2
      %v458 = vrot.slane %v249, 2
      %v459 = vrot.slane %v215, 2
      %v460 = vrot.slane %v250, 2
      %v461 = vrot.slane %v216, 2
      %v462 = vrot.slane %v251, 2
      %v463 = vrot.slane %v217, 2
      %v464 = vrot.slane %v252, 2
      %v465 = vrot.slane %v218, 2
      %v466 = vrot.slane %v253, 2
      %v467 = vrot.slane %v219, 2
      %v468 = vrot.slane %v254, 2
      %v469 = vrot.slane %v220, 2
      %v470 = vrot.slane %v255, 2
      %v471 = vrot.slane %v221, 2
      %v472 = vrot.slane %v256, 2
      %v473 = vrot.slane %v222, 2
      %v474 = vrot.slane %v257, 2
      %v475 = vrot.slane %v223, 2
      %v476 = vrot.slane %v258, 2
      %v477 = vrot.slane %v224, 2
      %v478 = vrot.slane %v275, 2
      %479 = vrot.lane.b32.xlu0 %v445, 126
      %v480 = vpop.permute.xlu0 %479
      %481 = vrot.lane.b32.xlu0 %v446, 126
      %v482 = vpop.permute.xlu0 %481
      %483 = vrot.lane.b32.xlu0 %v447, 126
      %v484 = vpop.permute.xlu0 %483
      %485 = vrot.lane.b32.xlu0 %v448, 126
      %v486 = vpop.permute.xlu0 %485
      %487 = vrot.lane.b32.xlu0 %v449, 126
      %v488 = vpop.permute.xlu0 %487
      %489 = vrot.lane.b32.xlu0 %v450, 126
      %v490 = vpop.permute.xlu0 %489
      %491 = vrot.lane.b32.xlu0 %v451, 126
      %v492 = vpop.permute.xlu0 %491
      %493 = vrot.lane.b32.xlu0 %v452, 126
      %v494 = vpop.permute.xlu0 %493
      %495 = vrot.lane.b32.xlu0 %v453, 126
      %v496 = vpop.permute.xlu0 %495
      %497 = vrot.lane.b32.xlu0 %v454, 126
      %v498 = vpop.permute.xlu0 %497
      %499 = vrot.lane.b32.xlu0 %v455, 126
      %v500 = vpop.permute.xlu0 %499
      %501 = vrot.lane.b32.xlu0 %v456, 126
      %v502 = vpop.permute.xlu0 %501
      %503 = vrot.lane.b32.xlu0 %v457, 126
      %v504 = vpop.permute.xlu0 %503
      %505 = vrot.lane.b32.xlu0 %v458, 126
      %v506 = vpop.permute.xlu0 %505
      %507 = vrot.lane.b32.xlu0 %v459, 126
      %v508 = vpop.permute.xlu0 %507
      %509 = vrot.lane.b32.xlu0 %v460, 126
      %v510 = vpop.permute.xlu0 %509
      %511 = vrot.lane.b32.xlu0 %v461, 126
      %v512 = vpop.permute.xlu0 %511
      %513 = vrot.lane.b32.xlu0 %v462, 126
      %v514 = vpop.permute.xlu0 %513
      %515 = vrot.lane.b32.xlu0 %v463, 126
      %v516 = vpop.permute.xlu0 %515
      %517 = vrot.lane.b32.xlu0 %v464, 126
      %v518 = vpop.permute.xlu0 %517
      %519 = vrot.lane.b32.xlu0 %v465, 126
      %v520 = vpop.permute.xlu0 %519
      %521 = vrot.lane.b32.xlu0 %v466, 126
      %v522 = vpop.permute.xlu0 %521
      %523 = vrot.lane.b32.xlu0 %v467, 126
      %v524 = vpop.permute.xlu0 %523
      %525 = vrot.lane.b32.xlu0 %v468, 126
      %v526 = vpop.permute.xlu0 %525
      %527 = vrot.lane.b32.xlu0 %v469, 126
      %v528 = vpop.permute.xlu0 %527
      %529 = vrot.lane.b32.xlu0 %v470, 126
      %v530 = vpop.permute.xlu0 %529
      %531 = vrot.lane.b32.xlu0 %v471, 126
      %v532 = vpop.permute.xlu0 %531
      %533 = vrot.lane.b32.xlu0 %v472, 126
      %v534 = vpop.permute.xlu0 %533
      %535 = vrot.lane.b32.xlu0 %v473, 126
      %v536 = vpop.permute.xlu0 %535
      %537 = vrot.lane.b32.xlu0 %v474, 126
      %v538 = vpop.permute.xlu0 %537
      %539 = vrot.lane.b32.xlu0 %v475, 126
      %v540 = vpop.permute.xlu0 %539
      %541 = vrot.lane.b32.xlu0 %v476, 126
      %v542 = vpop.permute.xlu0 %541
      %543 = vrot.lane.b32.xlu0 %v477, 126
      %v544 = vpop.permute.xlu0 %543
      %545 = vrot.lane.b32.xlu0 %v478, 126
      %v546 = vpop.permute.xlu0 %545
      %vm547 = vcmask 1031168
      %v548 = vsel %vm547, %v480, %v482
      %v549 = vsel %vm547, %v482, %v484
      %v550 = vsel %vm547, %v484, %v486
      %v551 = vsel %vm547, %v486, %v488
      %v552 = vsel %vm547, %v488, %v490
      %v553 = vsel %vm547, %v490, %v492
      %v554 = vsel %vm547, %v492, %v494
      %v555 = vsel %vm547, %v494, %v496
      %v556 = vsel %vm547, %v496, %v498
      %v557 = vsel %vm547, %v498, %v500
      %v558 = vsel %vm547, %v500, %v502
      %v559 = vsel %vm547, %v502, %v504
      %v560 = vsel %vm547, %v504, %v506
      %v561 = vsel %vm547, %v506, %v508
      %v562 = vsel %vm547, %v508, %v510
      %v563 = vsel %vm547, %v510, %v512
      %v564 = vsel %vm547, %v512, %v514
      %v565 = vsel %vm547, %v514, %v516
      %v566 = vsel %vm547, %v516, %v518
      %v567 = vsel %vm547, %v518, %v520
      %v568 = vsel %vm547, %v520, %v522
      %v569 = vsel %vm547, %v522, %v524
      %v570 = vsel %vm547, %v524, %v526
      %v571 = vsel %vm547, %v526, %v528
      %v572 = vsel %vm547, %v528, %v530
      %v573 = vsel %vm547, %v530, %v532
      %v574 = vsel %vm547, %v532, %v534
      %v575 = vsel %vm547, %v534, %v536
      %v576 = vsel %vm547, %v536, %v538
      %v577 = vsel %vm547, %v538, %v540
      %v578 = vsel %vm547, %v540, %v542
      %v579 = vsel %vm547, %v542, %v544
      %v580 = vsel %vm547, %v544, %v546
      %v614 = vrot.slane %v208, 7
      %v615 = vrot.slane %v243, 7
      %v616 = vrot.slane %v209, 7
      %v617 = vrot.slane %v244, 7
      %v618 = vrot.slane %v210, 7
      %v619 = vrot.slane %v245, 7
      %v620 = vrot.slane %v211, 7
      %v621 = vrot.slane %v246, 7
      %v622 = vrot.slane %v212, 7
      %v623 = vrot.slane %v247, 7
      %v624 = vrot.slane %v213, 7
      %v625 = vrot.slane %v248, 7
      %v626 = vrot.slane %v214, 7
      %v627 = vrot.slane %v249, 7
      %v628 = vrot.slane %v215, 7
      %v629 = vrot.slane %v250, 7
      %v630 = vrot.slane %v216, 7
      %v631 = vrot.slane %v251, 7
      %v632 = vrot.slane %v217, 7
      %v633 = vrot.slane %v252, 7
      %v634 = vrot.slane %v218, 7
      %v635 = vrot.slane %v253, 7
      %v636 = vrot.slane %v219, 7
      %v637 = vrot.slane %v254, 7
      %v638 = vrot.slane %v220, 7
      %v639 = vrot.slane %v255, 7
      %v640 = vrot.slane %v221, 7
      %v641 = vrot.slane %v256, 7
      %v642 = vrot.slane %v222, 7
      %v643 = vrot.slane %v257, 7
      %v644 = vrot.slane %v223, 7
      %v645 = vrot.slane %v258, 7
      %v646 = vrot.slane %v224, 7
      %v647 = vrot.slane %v275, 7
      %648 = vrot.lane.b32.xlu0 %v614, 62
      %v649 = vpop.permute.xlu0 %648
      %650 = vrot.lane.b32.xlu0 %v615, 62
      %v651 = vpop.permute.xlu0 %650
      %652 = vrot.lane.b32.xlu0 %v616, 62
      %v653 = vpop.permute.xlu0 %652
      %654 = vrot.lane.b32.xlu0 %v617, 62
      %v655 = vpop.permute.xlu0 %654
      %656 = vrot.lane.b32.xlu0 %v618, 62
      %v657 = vpop.permute.xlu0 %656
      %658 = vrot.lane.b32.xlu0 %v619, 62
      %v659 = vpop.permute.xlu0 %658
      %660 = vrot.lane.b32.xlu0 %v620, 62
      %v661 = vpop.permute.xlu0 %660
      %662 = vrot.lane.b32.xlu0 %v621, 62
      %v663 = vpop.permute.xlu0 %662
      %664 = vrot.lane.b32.xlu0 %v622, 62
      %v665 = vpop.permute.xlu0 %664
      %666 = vrot.lane.b32.xlu0 %v623, 62
      %v667 = vpop.permute.xlu0 %666
      %668 = vrot.lane.b32.xlu0 %v624, 62
      %v669 = vpop.permute.xlu0 %668
      %670 = vrot.lane.b32.xlu0 %v625, 62
      %v671 = vpop.permute.xlu0 %670
      %672 = vrot.lane.b32.xlu0 %v626, 62
      %v673 = vpop.permute.xlu0 %672
      %674 = vrot.lane.b32.xlu0 %v627, 62
      %v675 = vpop.permute.xlu0 %674
      %676 = vrot.lane.b32.xlu0 %v628, 62
      %v677 = vpop.permute.xlu0 %676
      %678 = vrot.lane.b32.xlu0 %v629, 62
      %v679 = vpop.permute.xlu0 %678
      %680 = vrot.lane.b32.xlu0 %v630, 62
      %v681 = vpop.permute.xlu0 %680
      %682 = vrot.lane.b32.xlu0 %v631, 62
      %v683 = vpop.permute.xlu0 %682
      %684 = vrot.lane.b32.xlu0 %v632, 62
      %v685 = vpop.permute.xlu0 %684
      %686 = vrot.lane.b32.xlu0 %v633, 62
      %v687 = vpop.permute.xlu0 %686
      %688 = vrot.lane.b32.xlu0 %v634, 62
      %v689 = vpop.permute.xlu0 %688
      %690 = vrot.lane.b32.xlu0 %v635, 62
      %v691 = vpop.permute.xlu0 %690
      %692 = vrot.lane.b32.xlu0 %v636, 62
      %v693 = vpop.permute.xlu0 %692
      %694 = vrot.lane.b32.xlu0 %v637, 62
      %v695 = vpop.permute.xlu0 %694
      %696 = vrot.lane.b32.xlu0 %v638, 62
      %v697 = vpop.permute.xlu0 %696
      %698 = vrot.lane.b32.xlu0 %v639, 62
      %v699 = vpop.permute.xlu0 %698
      %700 = vrot.lane.b32.xlu0 %v640, 62
      %v701 = vpop.permute.xlu0 %700
      %702 = vrot.lane.b32.xlu0 %v641, 62
      %v703 = vpop.permute.xlu0 %702
      %704 = vrot.lane.b32.xlu0 %v642, 62
      %v705 = vpop.permute.xlu0 %704
      %706 = vrot.lane.b32.xlu0 %v643, 62
      %v707 = vpop.permute.xlu0 %706
      %708 = vrot.lane.b32.xlu0 %v644, 62
      %v709 = vpop.permute.xlu0 %708
      %710 = vrot.lane.b32.xlu0 %v645, 62
      %v711 = vpop.permute.xlu0 %710
      %712 = vrot.lane.b32.xlu0 %v646, 62
      %v713 = vpop.permute.xlu0 %712
      %714 = vrot.lane.b32.xlu0 %v647, 62
      %v715 = vpop.permute.xlu0 %714
      %vm716 = vcmask 506880
      %v717 = vsel %vm716, %v649, %v651
      %v718 = vsel %vm716, %v651, %v653
      %v719 = vsel %vm716, %v653, %v655
      %v720 = vsel %vm716, %v655, %v657
      %v721 = vsel %vm716, %v657, %v659
      %v722 = vsel %vm716, %v659, %v661
      %v723 = vsel %vm716, %v661, %v663
      %v724 = vsel %vm716, %v663, %v665
      %v725 = vsel %vm716, %v665, %v667
      %v726 = vsel %vm716, %v667, %v669
      %v727 = vsel %vm716, %v669, %v671
      %v728 = vsel %vm716, %v671, %v673
      %v729 = vsel %vm716, %v673, %v675
      %v730 = vsel %vm716, %v675, %v677
      %v731 = vsel %vm716, %v677, %v679
      %v732 = vsel %vm716, %v679, %v681
      %v733 = vsel %vm716, %v681, %v683
      %v734 = vsel %vm716, %v683, %v685
      %v735 = vsel %vm716, %v685, %v687
      %v736 = vsel %vm716, %v687, %v689
      %v737 = vsel %vm716, %v689, %v691
      %v738 = vsel %vm716, %v691, %v693
      %v739 = vsel %vm716, %v693, %v695
      %v740 = vsel %vm716, %v695, %v697
      %v741 = vsel %vm716, %v697, %v699
      %v742 = vsel %vm716, %v699, %v701
      %v743 = vsel %vm716, %v701, %v703
      %v744 = vsel %vm716, %v703, %v705
      %v745 = vsel %vm716, %v705, %v707
      %v746 = vsel %vm716, %v707, %v709
      %v747 = vsel %vm716, %v709, %v711
      %v748 = vsel %vm716, %v711, %v713
      %v749 = vsel %vm716, %v713, %v715
      %v783 = vcombine.low %v208, %v208
      %v784 = vcombine.low %v209, %v209
      %v785 = vcombine.low %v210, %v210
      %v786 = vcombine.low %v211, %v211
      %v787 = vcombine.low %v212, %v212
      %v788 = vcombine.low %v213, %v213
      %v789 = vcombine.low %v214, %v214
      %v790 = vcombine.low %v215, %v215
      %v791 = vcombine.low %v216, %v216
      %v792 = vcombine.low %v217, %v217
      %v793 = vcombine.low %v218, %v218
      %v794 = vcombine.low %v219, %v219
      %v795 = vcombine.low %v220, %v220
      %v796 = vcombine.low %v221, %v221
      %v797 = vcombine.low %v222, %v222
      %v798 = vcombine.low %v223, %v223
      %v799 = vcombine.low %v224, %v224
      %800 = vrot.lane.b32.xlu0 %v783, 61
      %v801 = vpop.permute.xlu0 %800
      %802 = vrot.lane.b32.xlu0 %v208, 61
      %v803 = vpop.permute.xlu0 %802
      %804 = vrot.lane.b32.xlu0 %v784, 61
      %v805 = vpop.permute.xlu0 %804
      %806 = vrot.lane.b32.xlu0 %v209, 61
      %v807 = vpop.permute.xlu0 %806
      %808 = vrot.lane.b32.xlu0 %v785, 61
      %v809 = vpop.permute.xlu0 %808
      %810 = vrot.lane.b32.xlu0 %v210, 61
      %v811 = vpop.permute.xlu0 %810
      %812 = vrot.lane.b32.xlu0 %v786, 61
      %v813 = vpop.permute.xlu0 %812
      %814 = vrot.lane.b32.xlu0 %v211, 61
      %v815 = vpop.permute.xlu0 %814
      %816 = vrot.lane.b32.xlu0 %v787, 61
      %v817 = vpop.permute.xlu0 %816
      %818 = vrot.lane.b32.xlu0 %v212, 61
      %v819 = vpop.permute.xlu0 %818
      %820 = vrot.lane.b32.xlu0 %v788, 61
      %v821 = vpop.permute.xlu0 %820
      %822 = vrot.lane.b32.xlu0 %v213, 61
      %v823 = vpop.permute.xlu0 %822
      %824 = vrot.lane.b32.xlu0 %v789, 61
      %v825 = vpop.permute.xlu0 %824
      %826 = vrot.lane.b32.xlu0 %v214, 61
      %v827 = vpop.permute.xlu0 %826
      %828 = vrot.lane.b32.xlu0 %v790, 61
      %v829 = vpop.permute.xlu0 %828
      %830 = vrot.lane.b32.xlu0 %v215, 61
      %v831 = vpop.permute.xlu0 %830
      %832 = vrot.lane.b32.xlu0 %v791, 61
      %v833 = vpop.permute.xlu0 %832
      %834 = vrot.lane.b32.xlu0 %v216, 61
      %v835 = vpop.permute.xlu0 %834
      %836 = vrot.lane.b32.xlu0 %v792, 61
      %v837 = vpop.permute.xlu0 %836
      %838 = vrot.lane.b32.xlu0 %v217, 61
      %v839 = vpop.permute.xlu0 %838
      %840 = vrot.lane.b32.xlu0 %v793, 61
      %v841 = vpop.permute.xlu0 %840
      %842 = vrot.lane.b32.xlu0 %v218, 61
      %v843 = vpop.permute.xlu0 %842
      %844 = vrot.lane.b32.xlu0 %v794, 61
      %v845 = vpop.permute.xlu0 %844
      %846 = vrot.lane.b32.xlu0 %v219, 61
      %v847 = vpop.permute.xlu0 %846
      %848 = vrot.lane.b32.xlu0 %v795, 61
      %v849 = vpop.permute.xlu0 %848
      %850 = vrot.lane.b32.xlu0 %v220, 61
      %v851 = vpop.permute.xlu0 %850
      %852 = vrot.lane.b32.xlu0 %v796, 61
      %v853 = vpop.permute.xlu0 %852
      %854 = vrot.lane.b32.xlu0 %v221, 61
      %v855 = vpop.permute.xlu0 %854
      %856 = vrot.lane.b32.xlu0 %v797, 61
      %v857 = vpop.permute.xlu0 %856
      %858 = vrot.lane.b32.xlu0 %v222, 61
      %v859 = vpop.permute.xlu0 %858
      %860 = vrot.lane.b32.xlu0 %v798, 61
      %v861 = vpop.permute.xlu0 %860
      %862 = vrot.lane.b32.xlu0 %v223, 61
      %v863 = vpop.permute.xlu0 %862
      %864 = vrot.lane.b32.xlu0 %v799, 61
      %v865 = vpop.permute.xlu0 %864
      %866 = vrot.lane.b32.xlu0 %v224, 61
      %v867 = vpop.permute.xlu0 %866
      %vm868 = vcmask 498688
      %v869 = vsel %vm868, %v801, %v803
      %v870 = vsel %vm868, %v803, %v805
      %v871 = vsel %vm868, %v805, %v807
      %v872 = vsel %vm868, %v807, %v809
      %v873 = vsel %vm868, %v809, %v811
      %v874 = vsel %vm868, %v811, %v813
      %v875 = vsel %vm868, %v813, %v815
      %v876 = vsel %vm868, %v815, %v817
      %v877 = vsel %vm868, %v817, %v819
      %v878 = vsel %vm868, %v819, %v821
      %v879 = vsel %vm868, %v821, %v823
      %v880 = vsel %vm868, %v823, %v825
      %v881 = vsel %vm868, %v825, %v827
      %v882 = vsel %vm868, %v827, %v829
      %v883 = vsel %vm868, %v829, %v831
      %v884 = vsel %vm868, %v831, %v833
      %v885 = vsel %vm868, %v833, %v835
      %v886 = vsel %vm868, %v835, %v837
      %v887 = vsel %vm868, %v837, %v839
      %v888 = vsel %vm868, %v839, %v841
      %v889 = vsel %vm868, %v841, %v843
      %v890 = vsel %vm868, %v843, %v845
      %v891 = vsel %vm868, %v845, %v847
      %v892 = vsel %vm868, %v847, %v849
      %v893 = vsel %vm868, %v849, %v851
      %v894 = vsel %vm868, %v851, %v853
      %v895 = vsel %vm868, %v853, %v855
      %v896 = vsel %vm868, %v855, %v857
      %v897 = vsel %vm868, %v857, %v859
      %v898 = vsel %vm868, %v859, %v861
      %v899 = vsel %vm868, %v861, %v863
      %v900 = vsel %vm868, %v863, %v865
      %v901 = vsel %vm868, %v865, %v867
      %v935 = vrot.slane %v208, 1
      %v936 = vrot.slane %v243, 1
      %v937 = vrot.slane %v209, 1
      %v938 = vrot.slane %v244, 1
      %v939 = vrot.slane %v210, 1
      %v940 = vrot.slane %v245, 1
      %v941 = vrot.slane %v211, 1
      %v942 = vrot.slane %v246, 1
      %v943 = vrot.slane %v212, 1
      %v944 = vrot.slane %v247, 1
      %v945 = vrot.slane %v213, 1
      %v946 = vrot.slane %v248, 1
      %v947 = vrot.slane %v214, 1
      %v948 = vrot.slane %v249, 1
      %v949 = vrot.slane %v215, 1
      %v950 = vrot.slane %v250, 1
      %v951 = vrot.slane %v216, 1
      %v952 = vrot.slane %v251, 1
      %v953 = vrot.slane %v217, 1
      %v954 = vrot.slane %v252, 1
      %v955 = vrot.slane %v218, 1
      %v956 = vrot.slane %v253, 1
      %v957 = vrot.slane %v219, 1
      %v958 = vrot.slane %v254, 1
      %v959 = vrot.slane %v220, 1
      %v960 = vrot.slane %v255, 1
      %v961 = vrot.slane %v221, 1
      %v962 = vrot.slane %v256, 1
      %v963 = vrot.slane %v222, 1
      %v964 = vrot.slane %v257, 1
      %v965 = vrot.slane %v223, 1
      %v966 = vrot.slane %v258, 1
      %v967 = vrot.slane %v224, 1
      %v968 = vrot.slane %v275, 1
      %969 = vrot.lane.b32.xlu0 %v935, 60
      %v970 = vpop.permute.xlu0 %969
      %971 = vrot.lane.b32.xlu0 %v936, 60
      %v972 = vpop.permute.xlu0 %971
      %973 = vrot.lane.b32.xlu0 %v937, 60
      %v974 = vpop.permute.xlu0 %973
      %975 = vrot.lane.b32.xlu0 %v938, 60
      %v976 = vpop.permute.xlu0 %975
      %977 = vrot.lane.b32.xlu0 %v939, 60
      %v978 = vpop.permute.xlu0 %977
      %979 = vrot.lane.b32.xlu0 %v940, 60
      %v980 = vpop.permute.xlu0 %979
      %981 = vrot.lane.b32.xlu0 %v941, 60
      %v982 = vpop.permute.xlu0 %981
      %983 = vrot.lane.b32.xlu0 %v942, 60
      %v984 = vpop.permute.xlu0 %983
      %985 = vrot.lane.b32.xlu0 %v943, 60
      %v986 = vpop.permute.xlu0 %985
      %987 = vrot.lane.b32.xlu0 %v944, 60
      %v988 = vpop.permute.xlu0 %987
      %989 = vrot.lane.b32.xlu0 %v945, 60
      %v990 = vpop.permute.xlu0 %989
      %991 = vrot.lane.b32.xlu0 %v946, 60
      %v992 = vpop.permute.xlu0 %991
      %993 = vrot.lane.b32.xlu0 %v947, 60
      %v994 = vpop.permute.xlu0 %993
      %995 = vrot.lane.b32.xlu0 %v948, 60
      %v996 = vpop.permute.xlu0 %995
      %997 = vrot.lane.b32.xlu0 %v949, 60
      %v998 = vpop.permute.xlu0 %997
      %999 = vrot.lane.b32.xlu0 %v950, 60
      %v1000 = vpop.permute.xlu0 %999
      %1001 = vrot.lane.b32.xlu0 %v951, 60
      %v1002 = vpop.permute.xlu0 %1001
      %1003 = vrot.lane.b32.xlu0 %v952, 60
      %v1004 = vpop.permute.xlu0 %1003
      %1005 = vrot.lane.b32.xlu0 %v953, 60
      %v1006 = vpop.permute.xlu0 %1005
      %1007 = vrot.lane.b32.xlu0 %v954, 60
      %v1008 = vpop.permute.xlu0 %1007
      %1009 = vrot.lane.b32.xlu0 %v955, 60
      %v1010 = vpop.permute.xlu0 %1009
      %1011 = vrot.lane.b32.xlu0 %v956, 60
      %v1012 = vpop.permute.xlu0 %1011
      %1013 = vrot.lane.b32.xlu0 %v957, 60
      %v1014 = vpop.permute.xlu0 %1013
      %1015 = vrot.lane.b32.xlu0 %v958, 60
      %v1016 = vpop.permute.xlu0 %1015
      %1017 = vrot.lane.b32.xlu0 %v959, 60
      %v1018 = vpop.permute.xlu0 %1017
      %1019 = vrot.lane.b32.xlu0 %v960, 60
      %v1020 = vpop.permute.xlu0 %1019
      %1021 = vrot.lane.b32.xlu0 %v961, 60
      %v1022 = vpop.permute.xlu0 %1021
      %1023 = vrot.lane.b32.xlu0 %v962, 60
      %v1024 = vpop.permute.xlu0 %1023
      %1025 = vrot.lane.b32.xlu0 %v963, 60
      %v1026 = vpop.permute.xlu0 %1025
      %1027 = vrot.lane.b32.xlu0 %v964, 60
      %v1028 = vpop.permute.xlu0 %1027
      %1029 = vrot.lane.b32.xlu0 %v965, 60
      %v1030 = vpop.permute.xlu0 %1029
      %1031 = vrot.lane.b32.xlu0 %v966, 60
      %v1032 = vpop.permute.xlu0 %1031
      %1033 = vrot.lane.b32.xlu0 %v967, 60
      %v1034 = vpop.permute.xlu0 %1033
      %1035 = vrot.lane.b32.xlu0 %v968, 60
      %v1036 = vpop.permute.xlu0 %1035
      %vm1037 = vcmask 490496
      %v1038 = vsel %vm1037, %v970, %v972
      %v1039 = vsel %vm1037, %v972, %v974
      %v1040 = vsel %vm1037, %v974, %v976
      %v1041 = vsel %vm1037, %v976, %v978
      %v1042 = vsel %vm1037, %v978, %v980
      %v1043 = vsel %vm1037, %v980, %v982
      %v1044 = vsel %vm1037, %v982, %v984
      %v1045 = vsel %vm1037, %v984, %v986
      %v1046 = vsel %vm1037, %v986, %v988
      %v1047 = vsel %vm1037, %v988, %v990
      %v1048 = vsel %vm1037, %v990, %v992
      %v1049 = vsel %vm1037, %v992, %v994
      %v1050 = vsel %vm1037, %v994, %v996
      %v1051 = vsel %vm1037, %v996, %v998
      %v1052 = vsel %vm1037, %v998, %v1000
      %v1053 = vsel %vm1037, %v1000, %v1002
      %v1054 = vsel %vm1037, %v1002, %v1004
      %v1055 = vsel %vm1037, %v1004, %v1006
      %v1056 = vsel %vm1037, %v1006, %v1008
      %v1057 = vsel %vm1037, %v1008, %v1010
      %v1058 = vsel %vm1037, %v1010, %v1012
      %v1059 = vsel %vm1037, %v1012, %v1014
      %v1060 = vsel %vm1037, %v1014, %v1016
      %v1061 = vsel %vm1037, %v1016, %v1018
      %v1062 = vsel %vm1037, %v1018, %v1020
      %v1063 = vsel %vm1037, %v1020, %v1022
      %v1064 = vsel %vm1037, %v1022, %v1024
      %v1065 = vsel %vm1037, %v1024, %v1026
      %v1066 = vsel %vm1037, %v1026, %v1028
      %v1067 = vsel %vm1037, %v1028, %v1030
      %v1068 = vsel %vm1037, %v1030, %v1032
      %v1069 = vsel %vm1037, %v1032, %v1034
      %v1070 = vsel %vm1037, %v1034, %v1036
      %v1105 = vrot.slane %v243, 6
      %v1106 = vrot.slane %v209, 6
      %v1107 = vrot.slane %v244, 6
      %v1108 = vrot.slane %v210, 6
      %v1109 = vrot.slane %v245, 6
      %v1110 = vrot.slane %v211, 6
      %v1111 = vrot.slane %v246, 6
      %v1112 = vrot.slane %v212, 6
      %v1113 = vrot.slane %v247, 6
      %v1114 = vrot.slane %v213, 6
      %v1115 = vrot.slane %v248, 6
      %v1116 = vrot.slane %v214, 6
      %v1117 = vrot.slane %v249, 6
      %v1118 = vrot.slane %v215, 6
      %v1119 = vrot.slane %v250, 6
      %v1120 = vrot.slane %v216, 6
      %v1121 = vrot.slane %v251, 6
      %v1122 = vrot.slane %v217, 6
      %v1123 = vrot.slane %v252, 6
      %v1124 = vrot.slane %v218, 6
      %v1125 = vrot.slane %v253, 6
      %v1126 = vrot.slane %v219, 6
      %v1127 = vrot.slane %v254, 6
      %v1128 = vrot.slane %v220, 6
      %v1129 = vrot.slane %v255, 6
      %v1130 = vrot.slane %v221, 6
      %v1131 = vrot.slane %v256, 6
      %v1132 = vrot.slane %v222, 6
      %v1133 = vrot.slane %v257, 6
      %v1134 = vrot.slane %v223, 6
      %v1135 = vrot.slane %v258, 6
      %v1136 = vrot.slane %v224, 6
      %v1137 = vrot.slane %v275, 6
      %v1138 = vrot.slane %v225, 6
      %1139 = vrot.lane.b32.xlu0 %v1105, 124
      %v1140 = vpop.permute.xlu0 %1139
      %1141 = vrot.lane.b32.xlu0 %v1106, 124
      %v1142 = vpop.permute.xlu0 %1141
      %1143 = vrot.lane.b32.xlu0 %v1107, 124
      %v1144 = vpop.permute.xlu0 %1143
      %1145 = vrot.lane.b32.xlu0 %v1108, 124
      %v1146 = vpop.permute.xlu0 %1145
      %1147 = vrot.lane.b32.xlu0 %v1109, 124
      %v1148 = vpop.permute.xlu0 %1147
      %1149 = vrot.lane.b32.xlu0 %v1110, 124
      %v1150 = vpop.permute.xlu0 %1149
      %1151 = vrot.lane.b32.xlu0 %v1111, 124
      %v1152 = vpop.permute.xlu0 %1151
      %1153 = vrot.lane.b32.xlu0 %v1112, 124
      %v1154 = vpop.permute.xlu0 %1153
      %1155 = vrot.lane.b32.xlu0 %v1113, 124
      %v1156 = vpop.permute.xlu0 %1155
      %1157 = vrot.lane.b32.xlu0 %v1114, 124
      %v1158 = vpop.permute.xlu0 %1157
      %1159 = vrot.lane.b32.xlu0 %v1115, 124
      %v1160 = vpop.permute.xlu0 %1159
      %1161 = vrot.lane.b32.xlu0 %v1116, 124
      %v1162 = vpop.permute.xlu0 %1161
      %1163 = vrot.lane.b32.xlu0 %v1117, 124
      %v1164 = vpop.permute.xlu0 %1163
      %1165 = vrot.lane.b32.xlu0 %v1118, 124
      %v1166 = vpop.permute.xlu0 %1165
      %1167 = vrot.lane.b32.xlu0 %v1119, 124
      %v1168 = vpop.permute.xlu0 %1167
      %1169 = vrot.lane.b32.xlu0 %v1120, 124
      %v1170 = vpop.permute.xlu0 %1169
      %1171 = vrot.lane.b32.xlu0 %v1121, 124
      %v1172 = vpop.permute.xlu0 %1171
      %1173 = vrot.lane.b32.xlu0 %v1122, 124
      %v1174 = vpop.permute.xlu0 %1173
      %1175 = vrot.lane.b32.xlu0 %v1123, 124
      %v1176 = vpop.permute.xlu0 %1175
      %1177 = vrot.lane.b32.xlu0 %v1124, 124
      %v1178 = vpop.permute.xlu0 %1177
      %1179 = vrot.lane.b32.xlu0 %v1125, 124
      %v1180 = vpop.permute.xlu0 %1179
      %1181 = vrot.lane.b32.xlu0 %v1126, 124
      %v1182 = vpop.permute.xlu0 %1181
      %1183 = vrot.lane.b32.xlu0 %v1127, 124
      %v1184 = vpop.permute.xlu0 %1183
      %1185 = vrot.lane.b32.xlu0 %v1128, 124
      %v1186 = vpop.permute.xlu0 %1185
      %1187 = vrot.lane.b32.xlu0 %v1129, 124
      %v1188 = vpop.permute.xlu0 %1187
      %1189 = vrot.lane.b32.xlu0 %v1130, 124
      %v1190 = vpop.permute.xlu0 %1189
      %1191 = vrot.lane.b32.xlu0 %v1131, 124
      %v1192 = vpop.permute.xlu0 %1191
      %1193 = vrot.lane.b32.xlu0 %v1132, 124
      %v1194 = vpop.permute.xlu0 %1193
      %1195 = vrot.lane.b32.xlu0 %v1133, 124
      %v1196 = vpop.permute.xlu0 %1195
      %1197 = vrot.lane.b32.xlu0 %v1134, 124
      %v1198 = vpop.permute.xlu0 %1197
      %1199 = vrot.lane.b32.xlu0 %v1135, 124
      %v1200 = vpop.permute.xlu0 %1199
      %1201 = vrot.lane.b32.xlu0 %v1136, 124
      %v1202 = vpop.permute.xlu0 %1201
      %1203 = vrot.lane.b32.xlu0 %v1137, 124
      %v1204 = vpop.permute.xlu0 %1203
      %1205 = vrot.lane.b32.xlu0 %v1138, 124
      %v1206 = vpop.permute.xlu0 %1205
      %vm1207 = vcmask 1014784
      %v1208 = vsel %vm1207, %v1140, %v1142
      %v1209 = vsel %vm1207, %v1142, %v1144
      %v1210 = vsel %vm1207, %v1144, %v1146
      %v1211 = vsel %vm1207, %v1146, %v1148
      %v1212 = vsel %vm1207, %v1148, %v1150
      %v1213 = vsel %vm1207, %v1150, %v1152
      %v1214 = vsel %vm1207, %v1152, %v1154
      %v1215 = vsel %vm1207, %v1154, %v1156
      %v1216 = vsel %vm1207, %v1156, %v1158
      %v1217 = vsel %vm1207, %v1158, %v1160
      %v1218 = vsel %vm1207, %v1160, %v1162
      %v1219 = vsel %vm1207, %v1162, %v1164
      %v1220 = vsel %vm1207, %v1164, %v1166
      %v1221 = vsel %vm1207, %v1166, %v1168
      %v1222 = vsel %vm1207, %v1168, %v1170
      %v1223 = vsel %vm1207, %v1170, %v1172
      %v1224 = vsel %vm1207, %v1172, %v1174
      %v1225 = vsel %vm1207, %v1174, %v1176
      %v1226 = vsel %vm1207, %v1176, %v1178
      %v1227 = vsel %vm1207, %v1178, %v1180
      %v1228 = vsel %vm1207, %v1180, %v1182
      %v1229 = vsel %vm1207, %v1182, %v1184
      %v1230 = vsel %vm1207, %v1184, %v1186
      %v1231 = vsel %vm1207, %v1186, %v1188
      %v1232 = vsel %vm1207, %v1188, %v1190
      %v1233 = vsel %vm1207, %v1190, %v1192
      %v1234 = vsel %vm1207, %v1192, %v1194
      %v1235 = vsel %vm1207, %v1194, %v1196
      %v1236 = vsel %vm1207, %v1196, %v1198
      %v1237 = vsel %vm1207, %v1198, %v1200
      %v1238 = vsel %vm1207, %v1200, %v1202
      %v1239 = vsel %vm1207, %v1202, %v1204
      %v1240 = vsel %vm1207, %v1204, %v1206
      %v1274 = vrot.slane %v243, 3
      %v1275 = vrot.slane %v209, 3
      %v1276 = vrot.slane %v244, 3
      %v1277 = vrot.slane %v210, 3
      %v1278 = vrot.slane %v245, 3
      %v1279 = vrot.slane %v211, 3
      %v1280 = vrot.slane %v246, 3
      %v1281 = vrot.slane %v212, 3
      %v1282 = vrot.slane %v247, 3
      %v1283 = vrot.slane %v213, 3
      %v1284 = vrot.slane %v248, 3
      %v1285 = vrot.slane %v214, 3
      %v1286 = vrot.slane %v249, 3
      %v1287 = vrot.slane %v215, 3
      %v1288 = vrot.slane %v250, 3
      %v1289 = vrot.slane %v216, 3
      %v1290 = vrot.slane %v251, 3
      %v1291 = vrot.slane %v217, 3
      %v1292 = vrot.slane %v252, 3
      %v1293 = vrot.slane %v218, 3
      %v1294 = vrot.slane %v253, 3
      %v1295 = vrot.slane %v219, 3
      %v1296 = vrot.slane %v254, 3
      %v1297 = vrot.slane %v220, 3
      %v1298 = vrot.slane %v255, 3
      %v1299 = vrot.slane %v221, 3
      %v1300 = vrot.slane %v256, 3
      %v1301 = vrot.slane %v222, 3
      %v1302 = vrot.slane %v257, 3
      %v1303 = vrot.slane %v223, 3
      %v1304 = vrot.slane %v258, 3
      %v1305 = vrot.slane %v224, 3
      %v1306 = vrot.slane %v275, 3
      %v1307 = vrot.slane %v225, 3
      %1308 = vrot.lane.b32.xlu0 %v1274, 123
      %v1309 = vpop.permute.xlu0 %1308
      %1310 = vrot.lane.b32.xlu0 %v1275, 123
      %v1311 = vpop.permute.xlu0 %1310
      %1312 = vrot.lane.b32.xlu0 %v1276, 123
      %v1313 = vpop.permute.xlu0 %1312
      %1314 = vrot.lane.b32.xlu0 %v1277, 123
      %v1315 = vpop.permute.xlu0 %1314
      %1316 = vrot.lane.b32.xlu0 %v1278, 123
      %v1317 = vpop.permute.xlu0 %1316
      %1318 = vrot.lane.b32.xlu0 %v1279, 123
      %v1319 = vpop.permute.xlu0 %1318
      %1320 = vrot.lane.b32.xlu0 %v1280, 123
      %v1321 = vpop.permute.xlu0 %1320
      %1322 = vrot.lane.b32.xlu0 %v1281, 123
      %v1323 = vpop.permute.xlu0 %1322
      %1324 = vrot.lane.b32.xlu0 %v1282, 123
      %v1325 = vpop.permute.xlu0 %1324
      %1326 = vrot.lane.b32.xlu0 %v1283, 123
      %v1327 = vpop.permute.xlu0 %1326
      %1328 = vrot.lane.b32.xlu0 %v1284, 123
      %v1329 = vpop.permute.xlu0 %1328
      %1330 = vrot.lane.b32.xlu0 %v1285, 123
      %v1331 = vpop.permute.xlu0 %1330
      %1332 = vrot.lane.b32.xlu0 %v1286, 123
      %v1333 = vpop.permute.xlu0 %1332
      %1334 = vrot.lane.b32.xlu0 %v1287, 123
      %v1335 = vpop.permute.xlu0 %1334
      %1336 = vrot.lane.b32.xlu0 %v1288, 123
      %v1337 = vpop.permute.xlu0 %1336
      %1338 = vrot.lane.b32.xlu0 %v1289, 123
      %v1339 = vpop.permute.xlu0 %1338
      %1340 = vrot.lane.b32.xlu0 %v1290, 123
      %v1341 = vpop.permute.xlu0 %1340
      %1342 = vrot.lane.b32.xlu0 %v1291, 123
      %v1343 = vpop.permute.xlu0 %1342
      %1344 = vrot.lane.b32.xlu0 %v1292, 123
      %v1345 = vpop.permute.xlu0 %1344
      %1346 = vrot.lane.b32.xlu0 %v1293, 123
      %v1347 = vpop.permute.xlu0 %1346
      %1348 = vrot.lane.b32.xlu0 %v1294, 123
      %v1349 = vpop.permute.xlu0 %1348
      %1350 = vrot.lane.b32.xlu0 %v1295, 123
      %v1351 = vpop.permute.xlu0 %1350
      %1352 = vrot.lane.b32.xlu0 %v1296, 123
      %v1353 = vpop.permute.xlu0 %1352
      %1354 = vrot.lane.b32.xlu0 %v1297, 123
      %v1355 = vpop.permute.xlu0 %1354
      %1356 = vrot.lane.b32.xlu0 %v1298, 123
      %v1357 = vpop.permute.xlu0 %1356
      %1358 = vrot.lane.b32.xlu0 %v1299, 123
      %v1359 = vpop.permute.xlu0 %1358
      %1360 = vrot.lane.b32.xlu0 %v1300, 123
      %v1361 = vpop.permute.xlu0 %1360
      %1362 = vrot.lane.b32.xlu0 %v1301, 123
      %v1363 = vpop.permute.xlu0 %1362
      %1364 = vrot.lane.b32.xlu0 %v1302, 123
      %v1365 = vpop.permute.xlu0 %1364
      %1366 = vrot.lane.b32.xlu0 %v1303, 123
      %v1367 = vpop.permute.xlu0 %1366
      %1368 = vrot.lane.b32.xlu0 %v1304, 123
      %v1369 = vpop.permute.xlu0 %1368
      %1370 = vrot.lane.b32.xlu0 %v1305, 123
      %v1371 = vpop.permute.xlu0 %1370
      %1372 = vrot.lane.b32.xlu0 %v1306, 123
      %v1373 = vpop.permute.xlu0 %1372
      %1374 = vrot.lane.b32.xlu0 %v1307, 123
      %v1375 = vpop.permute.xlu0 %1374
      %vm1376 = vcmask 1006592
      %v1377 = vsel %vm1376, %v1309, %v1311
      %v1378 = vsel %vm1376, %v1311, %v1313
      %v1379 = vsel %vm1376, %v1313, %v1315
      %v1380 = vsel %vm1376, %v1315, %v1317
      %v1381 = vsel %vm1376, %v1317, %v1319
      %v1382 = vsel %vm1376, %v1319, %v1321
      %v1383 = vsel %vm1376, %v1321, %v1323
      %v1384 = vsel %vm1376, %v1323, %v1325
      %v1385 = vsel %vm1376, %v1325, %v1327
      %v1386 = vsel %vm1376, %v1327, %v1329
      %v1387 = vsel %vm1376, %v1329, %v1331
      %v1388 = vsel %vm1376, %v1331, %v1333
      %v1389 = vsel %vm1376, %v1333, %v1335
      %v1390 = vsel %vm1376, %v1335, %v1337
      %v1391 = vsel %vm1376, %v1337, %v1339
      %v1392 = vsel %vm1376, %v1339, %v1341
      %v1393 = vsel %vm1376, %v1341, %v1343
      %v1394 = vsel %vm1376, %v1343, %v1345
      %v1395 = vsel %vm1376, %v1345, %v1347
      %v1396 = vsel %vm1376, %v1347, %v1349
      %v1397 = vsel %vm1376, %v1349, %v1351
      %v1398 = vsel %vm1376, %v1351, %v1353
      %v1399 = vsel %vm1376, %v1353, %v1355
      %v1400 = vsel %vm1376, %v1355, %v1357
      %v1401 = vsel %vm1376, %v1357, %v1359
      %v1402 = vsel %vm1376, %v1359, %v1361
      %v1403 = vsel %vm1376, %v1361, %v1363
      %v1404 = vsel %vm1376, %v1363, %v1365
      %v1405 = vsel %vm1376, %v1365, %v1367
      %v1406 = vsel %vm1376, %v1367, %v1369
      %v1407 = vsel %vm1376, %v1369, %v1371
      %v1408 = vsel %vm1376, %v1371, %v1373
      %v1409 = vsel %vm1376, %v1373, %v1375
      %1443 = vrot.lane.b32.xlu0 %v243, 122
      %v1444 = vpop.permute.xlu0 %1443
      %1445 = vrot.lane.b32.xlu0 %v209, 122
      %v1446 = vpop.permute.xlu0 %1445
      %1447 = vrot.lane.b32.xlu0 %v244, 122
      %v1448 = vpop.permute.xlu0 %1447
      %1449 = vrot.lane.b32.xlu0 %v210, 122
      %v1450 = vpop.permute.xlu0 %1449
      %1451 = vrot.lane.b32.xlu0 %v245, 122
      %v1452 = vpop.permute.xlu0 %1451
      %1453 = vrot.lane.b32.xlu0 %v211, 122
      %v1454 = vpop.permute.xlu0 %1453
      %1455 = vrot.lane.b32.xlu0 %v246, 122
      %v1456 = vpop.permute.xlu0 %1455
      %1457 = vrot.lane.b32.xlu0 %v212, 122
      %v1458 = vpop.permute.xlu0 %1457
      %1459 = vrot.lane.b32.xlu0 %v247, 122
      %v1460 = vpop.permute.xlu0 %1459
      %1461 = vrot.lane.b32.xlu0 %v213, 122
      %v1462 = vpop.permute.xlu0 %1461
      %1463 = vrot.lane.b32.xlu0 %v248, 122
      %v1464 = vpop.permute.xlu0 %1463
      %1465 = vrot.lane.b32.xlu0 %v214, 122
      %v1466 = vpop.permute.xlu0 %1465
      %1467 = vrot.lane.b32.xlu0 %v249, 122
      %v1468 = vpop.permute.xlu0 %1467
      %1469 = vrot.lane.b32.xlu0 %v215, 122
      %v1470 = vpop.permute.xlu0 %1469
      %1471 = vrot.lane.b32.xlu0 %v250, 122
      %v1472 = vpop.permute.xlu0 %1471
      %1473 = vrot.lane.b32.xlu0 %v216, 122
      %v1474 = vpop.permute.xlu0 %1473
      %1475 = vrot.lane.b32.xlu0 %v251, 122
      %v1476 = vpop.permute.xlu0 %1475
      %1477 = vrot.lane.b32.xlu0 %v217, 122
      %v1478 = vpop.permute.xlu0 %1477
      %1479 = vrot.lane.b32.xlu0 %v252, 122
      %v1480 = vpop.permute.xlu0 %1479
      %1481 = vrot.lane.b32.xlu0 %v218, 122
      %v1482 = vpop.permute.xlu0 %1481
      %1483 = vrot.lane.b32.xlu0 %v253, 122
      %v1484 = vpop.permute.xlu0 %1483
      %1485 = vrot.lane.b32.xlu0 %v219, 122
      %v1486 = vpop.permute.xlu0 %1485
      %1487 = vrot.lane.b32.xlu0 %v254, 122
      %v1488 = vpop.permute.xlu0 %1487
      %1489 = vrot.lane.b32.xlu0 %v220, 122
      %v1490 = vpop.permute.xlu0 %1489
      %1491 = vrot.lane.b32.xlu0 %v255, 122
      %v1492 = vpop.permute.xlu0 %1491
      %1493 = vrot.lane.b32.xlu0 %v221, 122
      %v1494 = vpop.permute.xlu0 %1493
      %1495 = vrot.lane.b32.xlu0 %v256, 122
      %v1496 = vpop.permute.xlu0 %1495
      %1497 = vrot.lane.b32.xlu0 %v222, 122
      %v1498 = vpop.permute.xlu0 %1497
      %1499 = vrot.lane.b32.xlu0 %v257, 122
      %v1500 = vpop.permute.xlu0 %1499
      %1501 = vrot.lane.b32.xlu0 %v223, 122
      %v1502 = vpop.permute.xlu0 %1501
      %1503 = vrot.lane.b32.xlu0 %v258, 122
      %v1504 = vpop.permute.xlu0 %1503
      %1505 = vrot.lane.b32.xlu0 %v224, 122
      %v1506 = vpop.permute.xlu0 %1505
      %1507 = vrot.lane.b32.xlu0 %v275, 122
      %v1508 = vpop.permute.xlu0 %1507
      %1509 = vrot.lane.b32.xlu0 %v225, 122
      %v1510 = vpop.permute.xlu0 %1509
      %vm1511 = vcmask 998400
      %v1512 = vsel %vm1511, %v1444, %v1446
      %v1513 = vsel %vm1511, %v1446, %v1448
      %v1514 = vsel %vm1511, %v1448, %v1450
      %v1515 = vsel %vm1511, %v1450, %v1452
      %v1516 = vsel %vm1511, %v1452, %v1454
      %v1517 = vsel %vm1511, %v1454, %v1456
      %v1518 = vsel %vm1511, %v1456, %v1458
      %v1519 = vsel %vm1511, %v1458, %v1460
      %v1520 = vsel %vm1511, %v1460, %v1462
      %v1521 = vsel %vm1511, %v1462, %v1464
      %v1522 = vsel %vm1511, %v1464, %v1466
      %v1523 = vsel %vm1511, %v1466, %v1468
      %v1524 = vsel %vm1511, %v1468, %v1470
      %v1525 = vsel %vm1511, %v1470, %v1472
      %v1526 = vsel %vm1511, %v1472, %v1474
      %v1527 = vsel %vm1511, %v1474, %v1476
      %v1528 = vsel %vm1511, %v1476, %v1478
      %v1529 = vsel %vm1511, %v1478, %v1480
      %v1530 = vsel %vm1511, %v1480, %v1482
      %v1531 = vsel %vm1511, %v1482, %v1484
      %v1532 = vsel %vm1511, %v1484, %v1486
      %v1533 = vsel %vm1511, %v1486, %v1488
      %v1534 = vsel %vm1511, %v1488, %v1490
      %v1535 = vsel %vm1511, %v1490, %v1492
      %v1536 = vsel %vm1511, %v1492, %v1494
      %v1537 = vsel %vm1511, %v1494, %v1496
      %v1538 = vsel %vm1511, %v1496, %v1498
      %v1539 = vsel %vm1511, %v1498, %v1500
      %v1540 = vsel %vm1511, %v1500, %v1502
      %v1541 = vsel %vm1511, %v1502, %v1504
      %v1542 = vsel %vm1511, %v1504, %v1506
      %v1543 = vsel %vm1511, %v1506, %v1508
      %v1544 = vsel %vm1511, %v1508, %v1510
      %vm1545 = vcmask 1042432
      %v1546 = vsel %vm1545, %v208, %v379
      %v1547 = vsel %vm1545, %v243, %v380
      %v1548 = vsel %vm1545, %v209, %v381
      %v1549 = vsel %vm1545, %v244, %v382
      %v1550 = vsel %vm1545, %v210, %v383
      %v1551 = vsel %vm1545, %v245, %v384
      %v1552 = vsel %vm1545, %v211, %v385
      %v1553 = vsel %vm1545, %v246, %v386
      %v1554 = vsel %vm1545, %v212, %v387
      %v1555 = vsel %vm1545, %v247, %v388
      %v1556 = vsel %vm1545, %v213, %v389
      %v1557 = vsel %vm1545, %v248, %v390
      %v1558 = vsel %vm1545, %v214, %v391
      %v1559 = vsel %vm1545, %v249, %v392
      %v1560 = vsel %vm1545, %v215, %v393
      %v1561 = vsel %vm1545, %v250, %v394
      %v1562 = vsel %vm1545, %v216, %v395
      %v1563 = vsel %vm1545, %v251, %v396
      %v1564 = vsel %vm1545, %v217, %v397
      %v1565 = vsel %vm1545, %v252, %v398
      %v1566 = vsel %vm1545, %v218, %v399
      %v1567 = vsel %vm1545, %v253, %v400
      %v1568 = vsel %vm1545, %v219, %v401
      %v1569 = vsel %vm1545, %v254, %v402
      %v1570 = vsel %vm1545, %v220, %v403
      %v1571 = vsel %vm1545, %v255, %v404
      %v1572 = vsel %vm1545, %v221, %v405
      %v1573 = vsel %vm1545, %v256, %v406
      %v1574 = vsel %vm1545, %v222, %v407
      %v1575 = vsel %vm1545, %v257, %v408
      %v1576 = vsel %vm1545, %v223, %v409
      %v1577 = vsel %vm1545, %v258, %v410
      %v1578 = vsel %vm1545, %v224, %v411
      %vm1579 = vcmask 1045504
      %v1580 = vsel %vm1579, %v1546, %v548
      %v1581 = vsel %vm1579, %v1547, %v549
      %v1582 = vsel %vm1579, %v1548, %v550
      %v1583 = vsel %vm1579, %v1549, %v551
      %v1584 = vsel %vm1579, %v1550, %v552
      %v1585 = vsel %vm1579, %v1551, %v553
      %v1586 = vsel %vm1579, %v1552, %v554
      %v1587 = vsel %vm1579, %v1553, %v555
      %v1588 = vsel %vm1579, %v1554, %v556
      %v1589 = vsel %vm1579, %v1555, %v557
      %v1590 = vsel %vm1579, %v1556, %v558
      %v1591 = vsel %vm1579, %v1557, %v559
      %v1592 = vsel %vm1579, %v1558, %v560
      %v1593 = vsel %vm1579, %v1559, %v561
      %v1594 = vsel %vm1579, %v1560, %v562
      %v1595 = vsel %vm1579, %v1561, %v563
      %v1596 = vsel %vm1579, %v1562, %v564
      %v1597 = vsel %vm1579, %v1563, %v565
      %v1598 = vsel %vm1579, %v1564, %v566
      %v1599 = vsel %vm1579, %v1565, %v567
      %v1600 = vsel %vm1579, %v1566, %v568
      %v1601 = vsel %vm1579, %v1567, %v569
      %v1602 = vsel %vm1579, %v1568, %v570
      %v1603 = vsel %vm1579, %v1569, %v571
      %v1604 = vsel %vm1579, %v1570, %v572
      %v1605 = vsel %vm1579, %v1571, %v573
      %v1606 = vsel %vm1579, %v1572, %v574
      %v1607 = vsel %vm1579, %v1573, %v575
      %v1608 = vsel %vm1579, %v1574, %v576
      %v1609 = vsel %vm1579, %v1575, %v577
      %v1610 = vsel %vm1579, %v1576, %v578
      %v1611 = vsel %vm1579, %v1577, %v579
      %v1612 = vsel %vm1579, %v1578, %v580
      %vm1613 = vcmask 1040384
      %v1614 = vsel %vm1613, %v548, %v717
      %v1615 = vsel %vm1613, %v549, %v718
      %v1616 = vsel %vm1613, %v550, %v719
      %v1617 = vsel %vm1613, %v551, %v720
      %v1618 = vsel %vm1613, %v552, %v721
      %v1619 = vsel %vm1613, %v553, %v722
      %v1620 = vsel %vm1613, %v554, %v723
      %v1621 = vsel %vm1613, %v555, %v724
      %v1622 = vsel %vm1613, %v556, %v725
      %v1623 = vsel %vm1613, %v557, %v726
      %v1624 = vsel %vm1613, %v558, %v727
      %v1625 = vsel %vm1613, %v559, %v728
      %v1626 = vsel %vm1613, %v560, %v729
      %v1627 = vsel %vm1613, %v561, %v730
      %v1628 = vsel %vm1613, %v562, %v731
      %v1629 = vsel %vm1613, %v563, %v732
      %v1630 = vsel %vm1613, %v564, %v733
      %v1631 = vsel %vm1613, %v565, %v734
      %v1632 = vsel %vm1613, %v566, %v735
      %v1633 = vsel %vm1613, %v567, %v736
      %v1634 = vsel %vm1613, %v568, %v737
      %v1635 = vsel %vm1613, %v569, %v738
      %v1636 = vsel %vm1613, %v570, %v739
      %v1637 = vsel %vm1613, %v571, %v740
      %v1638 = vsel %vm1613, %v572, %v741
      %v1639 = vsel %vm1613, %v573, %v742
      %v1640 = vsel %vm1613, %v574, %v743
      %v1641 = vsel %vm1613, %v575, %v744
      %v1642 = vsel %vm1613, %v576, %v745
      %v1643 = vsel %vm1613, %v577, %v746
      %v1644 = vsel %vm1613, %v578, %v747
      %v1645 = vsel %vm1613, %v579, %v748
      %v1646 = vsel %vm1613, %v580, %v749
      %vm1647 = vcmask 1043456
      %v1648 = vsel %vm1647, %v1614, %v869
      %v1649 = vsel %vm1647, %v1615, %v870
      %v1650 = vsel %vm1647, %v1616, %v871
      %v1651 = vsel %vm1647, %v1617, %v872
      %v1652 = vsel %vm1647, %v1618, %v873
      %v1653 = vsel %vm1647, %v1619, %v874
      %v1654 = vsel %vm1647, %v1620, %v875
      %v1655 = vsel %vm1647, %v1621, %v876
      %v1656 = vsel %vm1647, %v1622, %v877
      %v1657 = vsel %vm1647, %v1623, %v878
      %v1658 = vsel %vm1647, %v1624, %v879
      %v1659 = vsel %vm1647, %v1625, %v880
      %v1660 = vsel %vm1647, %v1626, %v881
      %v1661 = vsel %vm1647, %v1627, %v882
      %v1662 = vsel %vm1647, %v1628, %v883
      %v1663 = vsel %vm1647, %v1629, %v884
      %v1664 = vsel %vm1647, %v1630, %v885
      %v1665 = vsel %vm1647, %v1631, %v886
      %v1666 = vsel %vm1647, %v1632, %v887
      %v1667 = vsel %vm1647, %v1633, %v888
      %v1668 = vsel %vm1647, %v1634, %v889
      %v1669 = vsel %vm1647, %v1635, %v890
      %v1670 = vsel %vm1647, %v1636, %v891
      %v1671 = vsel %vm1647, %v1637, %v892
      %v1672 = vsel %vm1647, %v1638, %v893
      %v1673 = vsel %vm1647, %v1639, %v894
      %v1674 = vsel %vm1647, %v1640, %v895
      %v1675 = vsel %vm1647, %v1641, %v896
      %v1676 = vsel %vm1647, %v1642, %v897
      %v1677 = vsel %vm1647, %v1643, %v898
      %v1678 = vsel %vm1647, %v1644, %v899
      %v1679 = vsel %vm1647, %v1645, %v900
      %v1680 = vsel %vm1647, %v1646, %v901
      %vm1681 = vcmask 1046528
      %v1682 = vsel %vm1681, %v1648, %v1038
      %v1683 = vsel %vm1681, %v1649, %v1039
      %v1684 = vsel %vm1681, %v1650, %v1040
      %v1685 = vsel %vm1681, %v1651, %v1041
      %v1686 = vsel %vm1681, %v1652, %v1042
      %v1687 = vsel %vm1681, %v1653, %v1043
      %v1688 = vsel %vm1681, %v1654, %v1044
      %v1689 = vsel %vm1681, %v1655, %v1045
      %v1690 = vsel %vm1681, %v1656, %v1046
      %v1691 = vsel %vm1681, %v1657, %v1047
      %v1692 = vsel %vm1681, %v1658, %v1048
      %v1693 = vsel %vm1681, %v1659, %v1049
      %v1694 = vsel %vm1681, %v1660, %v1050
      %v1695 = vsel %vm1681, %v1661, %v1051
      %v1696 = vsel %vm1681, %v1662, %v1052
      %v1697 = vsel %vm1681, %v1663, %v1053
      %v1698 = vsel %vm1681, %v1664, %v1054
      %v1699 = vsel %vm1681, %v1665, %v1055
      %v1700 = vsel %vm1681, %v1666, %v1056
      %v1701 = vsel %vm1681, %v1667, %v1057
      %v1702 = vsel %vm1681, %v1668, %v1058
      %v1703 = vsel %vm1681, %v1669, %v1059
      %v1704 = vsel %vm1681, %v1670, %v1060
      %v1705 = vsel %vm1681, %v1671, %v1061
      %v1706 = vsel %vm1681, %v1672, %v1062
      %v1707 = vsel %vm1681, %v1673, %v1063
      %v1708 = vsel %vm1681, %v1674, %v1064
      %v1709 = vsel %vm1681, %v1675, %v1065
      %v1710 = vsel %vm1681, %v1676, %v1066
      %v1711 = vsel %vm1681, %v1677, %v1067
      %v1712 = vsel %vm1681, %v1678, %v1068
      %v1713 = vsel %vm1681, %v1679, %v1069
      %v1714 = vsel %vm1681, %v1680, %v1070
      %vm1715 = vcmask 1041408
      %v1716 = vsel %vm1715, %v1038, %v1208
      %v1717 = vsel %vm1715, %v1039, %v1209
      %v1718 = vsel %vm1715, %v1040, %v1210
      %v1719 = vsel %vm1715, %v1041, %v1211
      %v1720 = vsel %vm1715, %v1042, %v1212
      %v1721 = vsel %vm1715, %v1043, %v1213
      %v1722 = vsel %vm1715, %v1044, %v1214
      %v1723 = vsel %vm1715, %v1045, %v1215
      %v1724 = vsel %vm1715, %v1046, %v1216
      %v1725 = vsel %vm1715, %v1047, %v1217
      %v1726 = vsel %vm1715, %v1048, %v1218
      %v1727 = vsel %vm1715, %v1049, %v1219
      %v1728 = vsel %vm1715, %v1050, %v1220
      %v1729 = vsel %vm1715, %v1051, %v1221
      %v1730 = vsel %vm1715, %v1052, %v1222
      %v1731 = vsel %vm1715, %v1053, %v1223
      %v1732 = vsel %vm1715, %v1054, %v1224
      %v1733 = vsel %vm1715, %v1055, %v1225
      %v1734 = vsel %vm1715, %v1056, %v1226
      %v1735 = vsel %vm1715, %v1057, %v1227
      %v1736 = vsel %vm1715, %v1058, %v1228
      %v1737 = vsel %vm1715, %v1059, %v1229
      %v1738 = vsel %vm1715, %v1060, %v1230
      %v1739 = vsel %vm1715, %v1061, %v1231
      %v1740 = vsel %vm1715, %v1062, %v1232
      %v1741 = vsel %vm1715, %v1063, %v1233
      %v1742 = vsel %vm1715, %v1064, %v1234
      %v1743 = vsel %vm1715, %v1065, %v1235
      %v1744 = vsel %vm1715, %v1066, %v1236
      %v1745 = vsel %vm1715, %v1067, %v1237
      %v1746 = vsel %vm1715, %v1068, %v1238
      %v1747 = vsel %vm1715, %v1069, %v1239
      %v1748 = vsel %vm1715, %v1070, %v1240
      %vm1749 = vcmask 1044480
      %v1750 = vsel %vm1749, %v1716, %v1377
      %v1751 = vsel %vm1749, %v1717, %v1378
      %v1752 = vsel %vm1749, %v1718, %v1379
      %v1753 = vsel %vm1749, %v1719, %v1380
      %v1754 = vsel %vm1749, %v1720, %v1381
      %v1755 = vsel %vm1749, %v1721, %v1382
      %v1756 = vsel %vm1749, %v1722, %v1383
      %v1757 = vsel %vm1749, %v1723, %v1384
      %v1758 = vsel %vm1749, %v1724, %v1385
      %v1759 = vsel %vm1749, %v1725, %v1386
      %v1760 = vsel %vm1749, %v1726, %v1387
      %v1761 = vsel %vm1749, %v1727, %v1388
      %v1762 = vsel %vm1749, %v1728, %v1389
      %v1763 = vsel %vm1749, %v1729, %v1390
      %v1764 = vsel %vm1749, %v1730, %v1391
      %v1765 = vsel %vm1749, %v1731, %v1392
      %v1766 = vsel %vm1749, %v1732, %v1393
      %v1767 = vsel %vm1749, %v1733, %v1394
      %v1768 = vsel %vm1749, %v1734, %v1395
      %v1769 = vsel %vm1749, %v1735, %v1396
      %v1770 = vsel %vm1749, %v1736, %v1397
      %v1771 = vsel %vm1749, %v1737, %v1398
      %v1772 = vsel %vm1749, %v1738, %v1399
      %v1773 = vsel %vm1749, %v1739, %v1400
      %v1774 = vsel %vm1749, %v1740, %v1401
      %v1775 = vsel %vm1749, %v1741, %v1402
      %v1776 = vsel %vm1749, %v1742, %v1403
      %v1777 = vsel %vm1749, %v1743, %v1404
      %v1778 = vsel %vm1749, %v1744, %v1405
      %v1779 = vsel %vm1749, %v1745, %v1406
      %v1780 = vsel %vm1749, %v1746, %v1407
      %v1781 = vsel %vm1749, %v1747, %v1408
      %v1782 = vsel %vm1749, %v1748, %v1409
      %v1783 = vld [vmem:[%s1] sm:$0xff]
      %v1784 = vld [vmem:[%s2] sm:$0xff]
      %1786 = vset.pattern.permute.xlu0 0
      %1787 = vperm.xlu0 %1786, %v1784
      %v1788 = vpop.permute.xlu0 %1787
      %vm1790 = vcmask 220160
      %v1792 = vsel %vm1790, %v1783, 0
      %v1794 = vsel %vm1545, %v1512, 0
      %v1796 = vsel %vm1545, %v1513, 0
      %v1798 = vsel %vm1545, %v1514, 0
      %v1800 = vsel %vm1545, %v1515, 0
      %v1802 = vsel %vm1545, %v1516, 0
      %v1804 = vsel %vm1545, %v1517, 0
      %v1806 = vsel %vm1545, %v1518, 0
      %v1808 = vsel %vm1545, %v1519, 0
      %v1810 = vsel %vm1545, %v1520, 0
      %v1812 = vsel %vm1545, %v1521, 0
      %v1814 = vsel %vm1545, %v1522, 0
      %v1816 = vsel %vm1545, %v1523, 0
      %v1818 = vsel %vm1545, %v1524, 0
      %v1820 = vsel %vm1545, %v1525, 0
      %v1822 = vsel %vm1545, %v1526, 0
      %v1824 = vsel %vm1545, %v1527, 0
      %v1826 = vsel %vm1545, %v1528, 0
      %v1828 = vsel %vm1545, %v1529, 0
      %v1830 = vsel %vm1545, %v1530, 0
      %v1832 = vsel %vm1545, %v1531, 0
      %v1834 = vsel %vm1545, %v1532, 0
      %v1836 = vsel %vm1545, %v1533, 0
      %v1838 = vsel %vm1545, %v1534, 0
      %v1840 = vsel %vm1545, %v1535, 0
      %v1842 = vsel %vm1545, %v1536, 0
      %v1844 = vsel %vm1545, %v1537, 0
      %v1846 = vsel %vm1545, %v1538, 0
      %v1848 = vsel %vm1545, %v1539, 0
      %v1850 = vsel %vm1545, %v1540, 0
      %v1852 = vsel %vm1545, %v1541, 0
      %v1854 = vsel %vm1545, %v1542, 0
      %v1856 = vsel %vm1545, %v1543, 0
      %v1858 = vsel %vm1545, %v1544, 0
      %1860 = vmatprep.subr.mxu0 0.0
      %1861 = vmatpush1.msra.mxu0 0.0
      %1862 = vmatprep.subr.mxu0 0.0
      %1863 = vmatpush1.msra.mxu0 0.0
      %1864 = vmatprep.subr.mxu0 0.0
      %1865 = vmatpush1.msra.mxu0 0.0
      %1866 = vmatprep.subr.mxu0 0.0
      %1867 = vmatpush1.msra.mxu0 0.0
      %1868 = vmatprep.subr.mxu0 0.0
      %1869 = vmatpush1.msra.mxu0 0.0
      %1870 = vmatprep.subr.mxu0 0.0
      %1871 = vmatpush1.msra.mxu0 0.0
      %1872 = vmatprep.subr.mxu0 0.0
      %1873 = vmatpush1.msra.mxu0 0.0
      %1874 = vmatprep.subr.mxu0 0.0
      %1875 = vmatpush1.msra.mxu0 0.0
      %1876 = vmatprep.subr.mxu0 0.0
      %1877 = vmatpush1.msra.mxu0 0.0
      %1878 = vmatprep.subr.mxu0 0.0
      %1879 = vmatpush1.msra.mxu0 0.0
      %1880 = vmatprep.subr.mxu0 0.0
      %1881 = vmatpush1.msra.mxu0 0.0
      %1882 = vmatprep.subr.mxu0 0.0
      %1883 = vmatpush1.msra.mxu0 0.0
      %1884 = vmatprep.subr.mxu0 %v1796
      %1885 = vmatpush1.msra.mxu0 %v1794
      %1886 = vmatprep.subr.mxu0 %v1751
      %1887 = vmatpush1.msra.mxu0 %v1750
      %1888 = vmatprep.subr.mxu0 %v1683
      %1889 = vmatpush1.msra.mxu0 %v1682
      %1890 = vmatprep.subr.mxu0 %v1581
      %1891 = vmatpush1.msra.mxu0 %v1580
      %1892 = vmatprep.subr.mxu0 0.0
      %1893 = vmatpush2.msra.mxu0 0.0
      %1894 = vmatprep.subr.mxu0 0.0
      %1895 = vmatpush2.msra.mxu0 0.0
      %1896 = vmatprep.subr.mxu0 0.0
      %1897 = vmatpush2.msra.mxu0 0.0
      %1898 = vmatprep.subr.mxu0 0.0
      %1899 = vmatpush2.msra.mxu0 0.0
      %1900 = vmatprep.subr.mxu0 0.0
      %1901 = vmatpush2.msra.mxu0 0.0
      %1902 = vmatprep.subr.mxu0 0.0
      %1903 = vmatpush2.msra.mxu0 0.0
      %1904 = vmatprep.subr.mxu0 0.0
      %1905 = vmatpush2.msra.mxu0 0.0
      %1906 = vmatprep.subr.mxu0 0.0
      %1907 = vmatpush2.msra.mxu0 0.0
      %1908 = vmatprep.subr.mxu0 0.0
      %1909 = vmatpush2.msra.mxu0 0.0
      %1910 = vmatprep.subr.mxu0 0.0
      %1911 = vmatpush2.msra.mxu0 0.0
      %1912 = vmatprep.subr.mxu0 0.0
      %1913 = vmatpush2.msra.mxu0 0.0
      %1914 = vmatprep.subr.mxu0 0.0
      %1915 = vmatpush2.msra.mxu0 0.0
      %1916 = vmatprep.subr.mxu0 0.0
      %1917 = vmatpush2.msra.mxu0 0.0
      %1918 = vmatprep.subr.mxu0 0.0
      %1919 = vmatpush2.msra.mxu0 0.0
      %1920 = vmatprep.subr.mxu0 0.0
      %1921 = vmatpush2.msra.mxu0 0.0
      %1922 = vmatprep.subr.mxu0 0.0
      %1923 = vmatpush2.msra.mxu0 0.0
      %1924 = vmatprep.mubr.f32.mxu0 0.0
      %1925 = vmatmul.mubr.f32.gmra.mxu0 %v1792
      %v1926 = vpop.f32.mrf.mxu0
      %v1927 = vadd.f32 %v1788, %v1926
      %v1928 = vpop.f32.mrf.mxu0
      %v1929 = vadd.f32 %v1788, %v1928
      %1930 = vdwg.mxu0
      %1931 = vmatprep.subr.mxu0 0.0
      %1932 = vmatpush1.msra.mxu0 0.0
      %1933 = vmatprep.subr.mxu0 0.0
      %1934 = vmatpush1.msra.mxu0 0.0
      %1935 = vmatprep.subr.mxu0 0.0
      %1936 = vmatpush1.msra.mxu0 0.0
      %1937 = vmatprep.subr.mxu0 0.0
      %1938 = vmatpush1.msra.mxu0 0.0
      %1939 = vmatprep.subr.mxu0 0.0
      %1940 = vmatpush1.msra.mxu0 0.0
      %1941 = vmatprep.subr.mxu0 0.0
      %1942 = vmatpush1.msra.mxu0 0.0
      %1943 = vmatprep.subr.mxu0 0.0
      %1944 = vmatpush1.msra.mxu0 0.0
      %1945 = vmatprep.subr.mxu0 0.0
      %1946 = vmatpush1.msra.mxu0 0.0
      %1947 = vmatprep.subr.mxu0 0.0
      %1948 = vmatpush1.msra.mxu0 0.0
      %1949 = vmatprep.subr.mxu0 0.0
      %1950 = vmatpush1.msra.mxu0 0.0
      %1951 = vmatprep.subr.mxu0 0.0
      %1952 = vmatpush1.msra.mxu0 0.0
      %1953 = vmatprep.subr.mxu0 0.0
      %1954 = vmatpush1.msra.mxu0 0.0
      %1955 = vmatprep.subr.mxu0 %v1800
      %1956 = vmatpush1.msra.mxu0 %v1798
      %1957 = vmatprep.subr.mxu0 %v1753
      %1958 = vmatpush1.msra.mxu0 %v1752
      %1959 = vmatprep.subr.mxu0 %v1685
      %1960 = vmatpush1.msra.mxu0 %v1684
      %1961 = vmatprep.subr.mxu0 %v1583
      %1962 = vmatpush1.msra.mxu0 %v1582
      %1963 = vmatprep.subr.mxu0 0.0
      %1964 = vmatpush2.msra.mxu0 0.0
      %1965 = vmatprep.subr.mxu0 0.0
      %1966 = vmatpush2.msra.mxu0 0.0
      %1967 = vmatprep.subr.mxu0 0.0
      %1968 = vmatpush2.msra.mxu0 0.0
      %1969 = vmatprep.subr.mxu0 0.0
      %1970 = vmatpush2.msra.mxu0 0.0
      %1971 = vmatprep.subr.mxu0 0.0
      %1972 = vmatpush2.msra.mxu0 0.0
      %1973 = vmatprep.subr.mxu0 0.0
      %1974 = vmatpush2.msra.mxu0 0.0
      %1975 = vmatprep.subr.mxu0 0.0
      %1976 = vmatpush2.msra.mxu0 0.0
      %1977 = vmatprep.subr.mxu0 0.0
      %1978 = vmatpush2.msra.mxu0 0.0
      %1979 = vmatprep.subr.mxu0 0.0
      %1980 = vmatpush2.msra.mxu0 0.0
      %1981 = vmatprep.subr.mxu0 0.0
      %1982 = vmatpush2.msra.mxu0 0.0
      %1983 = vmatprep.subr.mxu0 0.0
      %1984 = vmatpush2.msra.mxu0 0.0
      %1985 = vmatprep.subr.mxu0 0.0
      %1986 = vmatpush2.msra.mxu0 0.0
      %1987 = vmatprep.subr.mxu0 0.0
      %1988 = vmatpush2.msra.mxu0 0.0
      %1989 = vmatprep.subr.mxu0 0.0
      %1990 = vmatpush2.msra.mxu0 0.0
      %1991 = vmatprep.subr.mxu0 0.0
      %1992 = vmatpush2.msra.mxu0 0.0
      %1993 = vmatprep.subr.mxu0 0.0
      %1994 = vmatpush2.msra.mxu0 0.0
      %1995 = vmatprep.mubr.f32.mxu0 0.0
      %1996 = vmatmul.mubr.f32.gmra.mxu0 %v1792
      %v1997 = vpop.f32.mrf.mxu0
      %v1998 = vadd.f32 %v1788, %v1997
      %v1999 = vpop.f32.mrf.mxu0
      %v2000 = vadd.f32 %v1788, %v1999
      %2001 = vdwg.mxu0
      %2002 = vmatprep.subr.mxu0 0.0
      %2003 = vmatpush1.msra.mxu0 0.0
      %2004 = vmatprep.subr.mxu0 0.0
      %2005 = vmatpush1.msra.mxu0 0.0
      %2006 = vmatprep.subr.mxu0 0.0
      %2007 = vmatpush1.msra.mxu0 0.0
      %2008 = vmatprep.subr.mxu0 0.0
      %2009 = vmatpush1.msra.mxu0 0.0
      %2010 = vmatprep.subr.mxu0 0.0
      %2011 = vmatpush1.msra.mxu0 0.0
      %2012 = vmatprep.subr.mxu0 0.0
      %2013 = vmatpush1.msra.mxu0 0.0
      %2014 = vmatprep.subr.mxu0 0.0
      %2015 = vmatpush1.msra.mxu0 0.0
      %2016 = vmatprep.subr.mxu0 0.0
      %2017 = vmatpush1.msra.mxu0 0.0
      %2018 = vmatprep.subr.mxu0 0.0
      %2019 = vmatpush1.msra.mxu0 0.0
      %2020 = vmatprep.subr.mxu0 0.0
      %2021 = vmatpush1.msra.mxu0 0.0
      %2022 = vmatprep.subr.mxu0 0.0
      %2023 = vmatpush1.msra.mxu0 0.0
      %2024 = vmatprep.subr.mxu0 0.0
      %2025 = vmatpush1.msra.mxu0 0.0
      %2026 = vmatprep.subr.mxu0 %v1804
      %2027 = vmatpush1.msra.mxu0 %v1802
      %2028 = vmatprep.subr.mxu0 %v1755
      %2029 = vmatpush1.msra.mxu0 %v1754
      %2030 = vmatprep.subr.mxu0 %v1687
      %2031 = vmatpush1.msra.mxu0 %v1686
      %2032 = vmatprep.subr.mxu0 %v1585
      %2033 = vmatpush1.msra.mxu0 %v1584
      %2034 = vmatprep.subr.mxu0 0.0
      %2035 = vmatpush2.msra.mxu0 0.0
      %2036 = vmatprep.subr.mxu0 0.0
      %2037 = vmatpush2.msra.mxu0 0.0
      %2038 = vmatprep.subr.mxu0 0.0
      %2039 = vmatpush2.msra.mxu0 0.0
      %2040 = vmatprep.subr.mxu0 0.0
      %2041 = vmatpush2.msra.mxu0 0.0
      %2042 = vmatprep.subr.mxu0 0.0
      %2043 = vmatpush2.msra.mxu0 0.0
      %2044 = vmatprep.subr.mxu0 0.0
      %2045 = vmatpush2.msra.mxu0 0.0
      %2046 = vmatprep.subr.mxu0 0.0
      %2047 = vmatpush2.msra.mxu0 0.0
      %2048 = vmatprep.subr.mxu0 0.0
      %2049 = vmatpush2.msra.mxu0 0.0
      %2050 = vmatprep.subr.mxu0 0.0
      %2051 = vmatpush2.msra.mxu0 0.0
      %2052 = vmatprep.subr.mxu0 0.0
      %2053 = vmatpush2.msra.mxu0 0.0
      %2054 = vmatprep.subr.mxu0 0.0
      %2055 = vmatpush2.msra.mxu0 0.0
      %2056 = vmatprep.subr.mxu0 0.0
      %2057 = vmatpush2.msra.mxu0 0.0
      %2058 = vmatprep.subr.mxu0 0.0
      %2059 = vmatpush2.msra.mxu0 0.0
      %2060 = vmatprep.subr.mxu0 0.0
      %2061 = vmatpush2.msra.mxu0 0.0
      %2062 = vmatprep.subr.mxu0 0.0
      %2063 = vmatpush2.msra.mxu0 0.0
      %2064 = vmatprep.subr.mxu0 0.0
      %2065 = vmatpush2.msra.mxu0 0.0
      %2066 = vmatprep.mubr.f32.mxu0 0.0
      %2067 = vmatmul.mubr.f32.gmra.mxu0 %v1792
      %v2068 = vpop.f32.mrf.mxu0
      %v2069 = vadd.f32 %v1788, %v2068
      %v2070 = vpop.f32.mrf.mxu0
      %v2071 = vadd.f32 %v1788, %v2070
      %2072 = vdwg.mxu0
      %2073 = vmatprep.subr.mxu0 0.0
      %2074 = vmatpush1.msra.mxu0 0.0
      %2075 = vmatprep.subr.mxu0 0.0
      %2076 = vmatpush1.msra.mxu0 0.0
      %2077 = vmatprep.subr.mxu0 0.0
      %2078 = vmatpush1.msra.mxu0 0.0
      %2079 = vmatprep.subr.mxu0 0.0
      %2080 = vmatpush1.msra.mxu0 0.0
      %2081 = vmatprep.subr.mxu0 0.0
      %2082 = vmatpush1.msra.mxu0 0.0
      %2083 = vmatprep.subr.mxu0 0.0
      %2084 = vmatpush1.msra.mxu0 0.0
      %2085 = vmatprep.subr.mxu0 0.0
      %2086 = vmatpush1.msra.mxu0 0.0
      %2087 = vmatprep.subr.mxu0 0.0
      %2088 = vmatpush1.msra.mxu0 0.0
      %2089 = vmatprep.subr.mxu0 0.0
      %2090 = vmatpush1.msra.mxu0 0.0
      %2091 = vmatprep.subr.mxu0 0.0
      %2092 = vmatpush1.msra.mxu0 0.0
      %2093 = vmatprep.subr.mxu0 0.0
      %2094 = vmatpush1.msra.mxu0 0.0
      %2095 = vmatprep.subr.mxu0 0.0
      %2096 = vmatpush1.msra.mxu0 0.0
      %2097 = vmatprep.subr.mxu0 %v1808
      %2098 = vmatpush1.msra.mxu0 %v1806
      %2099 = vmatprep.subr.mxu0 %v1757
      %2100 = vmatpush1.msra.mxu0 %v1756
      %2101 = vmatprep.subr.mxu0 %v1689
      %2102 = vmatpush1.msra.mxu0 %v1688
      %2103 = vmatprep.subr.mxu0 %v1587
      %2104 = vmatpush1.msra.mxu0 %v1586
      %2105 = vmatprep.subr.mxu0 0.0
      %2106 = vmatpush2.msra.mxu0 0.0
      %2107 = vmatprep.subr.mxu0 0.0
      %2108 = vmatpush2.msra.mxu0 0.0
      %2109 = vmatprep.subr.mxu0 0.0
      %2110 = vmatpush2.msra.mxu0 0.0
      %2111 = vmatprep.subr.mxu0 0.0
      %2112 = vmatpush2.msra.mxu0 0.0
      %2113 = vmatprep.subr.mxu0 0.0
      %2114 = vmatpush2.msra.mxu0 0.0
      %2115 = vmatprep.subr.mxu0 0.0
      %2116 = vmatpush2.msra.mxu0 0.0
      %2117 = vmatprep.subr.mxu0 0.0
      %2118 = vmatpush2.msra.mxu0 0.0
      %2119 = vmatprep.subr.mxu0 0.0
      %2120 = vmatpush2.msra.mxu0 0.0
      %2121 = vmatprep.subr.mxu0 0.0
      %2122 = vmatpush2.msra.mxu0 0.0
      %2123 = vmatprep.subr.mxu0 0.0
      %2124 = vmatpush2.msra.mxu0 0.0
      %2125 = vmatprep.subr.mxu0 0.0
      %2126 = vmatpush2.msra.mxu0 0.0
      %2127 = vmatprep.subr.mxu0 0.0
      %2128 = vmatpush2.msra.mxu0 0.0
      %2129 = vmatprep.subr.mxu0 0.0
      %2130 = vmatpush2.msra.mxu0 0.0
      %2131 = vmatprep.subr.mxu0 0.0
      %2132 = vmatpush2.msra.mxu0 0.0
      %2133 = vmatprep.subr.mxu0 0.0
      %2134 = vmatpush2.msra.mxu0 0.0
      %2135 = vmatprep.subr.mxu0 0.0
      %2136 = vmatpush2.msra.mxu0 0.0
      %2137 = vmatprep.mubr.f32.mxu0 0.0
      %2138 = vmatmul.mubr.f32.gmra.mxu0 %v1792
      %v2139 = vpop.f32.mrf.mxu0
      %v2140 = vadd.f32 %v1788, %v2139
      %v2141 = vpop.f32.mrf.mxu0
      %v2142 = vadd.f32 %v1788, %v2141
      %2143 = vdwg.mxu0
      %2144 = vmatprep.subr.mxu0 0.0
      %2145 = vmatpush1.msra.mxu0 0.0
      %2146 = vmatprep.subr.mxu0 0.0
      %2147 = vmatpush1.msra.mxu0 0.0
      %2148 = vmatprep.subr.mxu0 0.0
      %2149 = vmatpush1.msra.mxu0 0.0
      %2150 = vmatprep.subr.mxu0 0.0
      %2151 = vmatpush1.msra.mxu0 0.0
      %2152 = vmatprep.subr.mxu0 0.0
      %2153 = vmatpush1.msra.mxu0 0.0
      %2154 = vmatprep.subr.mxu0 0.0
      %2155 = vmatpush1.msra.mxu0 0.0
      %2156 = vmatprep.subr.mxu0 0.0
      %2157 = vmatpush1.msra.mxu0 0.0
      %2158 = vmatprep.subr.mxu0 0.0
      %2159 = vmatpush1.msra.mxu0 0.0
      %2160 = vmatprep.subr.mxu0 0.0
      %2161 = vmatpush1.msra.mxu0 0.0
      %2162 = vmatprep.subr.mxu0 0.0
      %2163 = vmatpush1.msra.mxu0 0.0
      %2164 = vmatprep.subr.mxu0 0.0
      %2165 = vmatpush1.msra.mxu0 0.0
      %2166 = vmatprep.subr.mxu0 0.0
      %2167 = vmatpush1.msra.mxu0 0.0
      %2168 = vmatprep.subr.mxu0 %v1812
      %2169 = vmatpush1.msra.mxu0 %v1810
      %2170 = vmatprep.subr.mxu0 %v1759
      %2171 = vmatpush1.msra.mxu0 %v1758
      %2172 = vmatprep.subr.mxu0 %v1691
      %2173 = vmatpush1.msra.mxu0 %v1690
      %2174 = vmatprep.subr.mxu0 %v1589
      %2175 = vmatpush1.msra.mxu0 %v1588
      %2176 = vmatprep.subr.mxu0 0.0
      %2177 = vmatpush2.msra.mxu0 0.0
      %2178 = vmatprep.subr.mxu0 0.0
      %2179 = vmatpush2.msra.mxu0 0.0
      %2180 = vmatprep.subr.mxu0 0.0
      %2181 = vmatpush2.msra.mxu0 0.0
      %2182 = vmatprep.subr.mxu0 0.0
      %2183 = vmatpush2.msra.mxu0 0.0
      %2184 = vmatprep.subr.mxu0 0.0
      %2185 = vmatpush2.msra.mxu0 0.0
      %2186 = vmatprep.subr.mxu0 0.0
      %2187 = vmatpush2.msra.mxu0 0.0
      %2188 = vmatprep.subr.mxu0 0.0
      %2189 = vmatpush2.msra.mxu0 0.0
      %2190 = vmatprep.subr.mxu0 0.0
      %2191 = vmatpush2.msra.mxu0 0.0
      %2192 = vmatprep.subr.mxu0 0.0
      %2193 = vmatpush2.msra.mxu0 0.0
      %2194 = vmatprep.subr.mxu0 0.0
      %2195 = vmatpush2.msra.mxu0 0.0
      %2196 = vmatprep.subr.mxu0 0.0
      %2197 = vmatpush2.msra.mxu0 0.0
      %2198 = vmatprep.subr.mxu0 0.0
      %2199 = vmatpush2.msra.mxu0 0.0
      %2200 = vmatprep.subr.mxu0 0.0
      %2201 = vmatpush2.msra.mxu0 0.0
      %2202 = vmatprep.subr.mxu0 0.0
      %2203 = vmatpush2.msra.mxu0 0.0
      %2204 = vmatprep.subr.mxu0 0.0
      %2205 = vmatpush2.msra.mxu0 0.0
      %2206 = vmatprep.subr.mxu0 0.0
      %2207 = vmatpush2.msra.mxu0 0.0
      %2208 = vmatprep.mubr.f32.mxu0 0.0
      %2209 = vmatmul.mubr.f32.gmra.mxu0 %v1792
      %v2210 = vpop.f32.mrf.mxu0
      %v2211 = vadd.f32 %v1788, %v2210
      %v2212 = vpop.f32.mrf.mxu0
      %v2213 = vadd.f32 %v1788, %v2212
      %2214 = vdwg.mxu0
      %2215 = vmatprep.subr.mxu0 0.0
      %2216 = vmatpush1.msra.mxu0 0.0
      %2217 = vmatprep.subr.mxu0 0.0
      %2218 = vmatpush1.msra.mxu0 0.0
      %2219 = vmatprep.subr.mxu0 0.0
      %2220 = vmatpush1.msra.mxu0 0.0
      %2221 = vmatprep.subr.mxu0 0.0
      %2222 = vmatpush1.msra.mxu0 0.0
      %2223 = vmatprep.subr.mxu0 0.0
      %2224 = vmatpush1.msra.mxu0 0.0
      %2225 = vmatprep.subr.mxu0 0.0
      %2226 = vmatpush1.msra.mxu0 0.0
      %2227 = vmatprep.subr.mxu0 0.0
      %2228 = vmatpush1.msra.mxu0 0.0
      %2229 = vmatprep.subr.mxu0 0.0
      %2230 = vmatpush1.msra.mxu0 0.0
      %2231 = vmatprep.subr.mxu0 0.0
      %2232 = vmatpush1.msra.mxu0 0.0
      %2233 = vmatprep.subr.mxu0 0.0
      %2234 = vmatpush1.msra.mxu0 0.0
      %2235 = vmatprep.subr.mxu0 0.0
      %2236 = vmatpush1.msra.mxu0 0.0
      %2237 = vmatprep.subr.mxu0 0.0
      %2238 = vmatpush1.msra.mxu0 0.0
      %2239 = vmatprep.subr.mxu0 %v1816
      %2240 = vmatpush1.msra.mxu0 %v1814
      %2241 = vmatprep.subr.mxu0 %v1761
      %2242 = vmatpush1.msra.mxu0 %v1760
      %2243 = vmatprep.subr.mxu0 %v1693
      %2244 = vmatpush1.msra.mxu0 %v1692
      %2245 = vmatprep.subr.mxu0 %v1591
      %2246 = vmatpush1.msra.mxu0 %v1590
      %2247 = vmatprep.subr.mxu0 0.0
      %2248 = vmatpush2.msra.mxu0 0.0
      %2249 = vmatprep.subr.mxu0 0.0
      %2250 = vmatpush2.msra.mxu0 0.0
      %2251 = vmatprep.subr.mxu0 0.0
      %2252 = vmatpush2.msra.mxu0 0.0
      %2253 = vmatprep.subr.mxu0 0.0
      %2254 = vmatpush2.msra.mxu0 0.0
      %2255 = vmatprep.subr.mxu0 0.0
      %2256 = vmatpush2.msra.mxu0 0.0
      %2257 = vmatprep.subr.mxu0 0.0
      %2258 = vmatpush2.msra.mxu0 0.0
      %2259 = vmatprep.subr.mxu0 0.0
      %2260 = vmatpush2.msra.mxu0 0.0
      %2261 = vmatprep.subr.mxu0 0.0
      %2262 = vmatpush2.msra.mxu0 0.0
      %2263 = vmatprep.subr.mxu0 0.0
      %2264 = vmatpush2.msra.mxu0 0.0
      %2265 = vmatprep.subr.mxu0 0.0
      %2266 = vmatpush2.msra.mxu0 0.0
      %2267 = vmatprep.subr.mxu0 0.0
      %2268 = vmatpush2.msra.mxu0 0.0
      %2269 = vmatprep.subr.mxu0 0.0
      %2270 = vmatpush2.msra.mxu0 0.0
      %2271 = vmatprep.subr.mxu0 0.0
      %2272 = vmatpush2.msra.mxu0 0.0
      %2273 = vmatprep.subr.mxu0 0.0
      %2274 = vmatpush2.msra.mxu0 0.0
      %2275 = vmatprep.subr.mxu0 0.0
      %2276 = vmatpush2.msra.mxu0 0.0
      %2277 = vmatprep.subr.mxu0 0.0
      %2278 = vmatpush2.msra.mxu0 0.0
      %2279 = vmatprep.mubr.f32.mxu0 0.0
      %2280 = vmatmul.mubr.f32.gmra.mxu0 %v1792
      %v2281 = vpop.f32.mrf.mxu0
      %v2282 = vadd.f32 %v1788, %v2281
      %v2283 = vpop.f32.mrf.mxu0
      %v2284 = vadd.f32 %v1788, %v2283
      %2285 = vdwg.mxu0
      %2286 = vmatprep.subr.mxu0 0.0
      %2287 = vmatpush1.msra.mxu0 0.0
      %2288 = vmatprep.subr.mxu0 0.0
      %2289 = vmatpush1.msra.mxu0 0.0
      %2290 = vmatprep.subr.mxu0 0.0
      %2291 = vmatpush1.msra.mxu0 0.0
      %2292 = vmatprep.subr.mxu0 0.0
      %2293 = vmatpush1.msra.mxu0 0.0
      %2294 = vmatprep.subr.mxu0 0.0
      %2295 = vmatpush1.msra.mxu0 0.0
      %2296 = vmatprep.subr.mxu0 0.0
      %2297 = vmatpush1.msra.mxu0 0.0
      %2298 = vmatprep.subr.mxu0 0.0
      %2299 = vmatpush1.msra.mxu0 0.0
      %2300 = vmatprep.subr.mxu0 0.0
      %2301 = vmatpush1.msra.mxu0 0.0
      %2302 = vmatprep.subr.mxu0 0.0
      %2303 = vmatpush1.msra.mxu0 0.0
      %2304 = vmatprep.subr.mxu0 0.0
      %2305 = vmatpush1.msra.mxu0 0.0
      %2306 = vmatprep.subr.mxu0 0.0
      %2307 = vmatpush1.msra.mxu0 0.0
      %2308 = vmatprep.subr.mxu0 0.0
      %2309 = vmatpush1.msra.mxu0 0.0
      %2310 = vmatprep.subr.mxu0 %v1820
      %2311 = vmatpush1.msra.mxu0 %v1818
      %2312 = vmatprep.subr.mxu0 %v1763
      %2313 = vmatpush1.msra.mxu0 %v1762
      %2314 = vmatprep.subr.mxu0 %v1695
      %2315 = vmatpush1.msra.mxu0 %v1694
      %2316 = vmatprep.subr.mxu0 %v1593
      %2317 = vmatpush1.msra.mxu0 %v1592
      %2318 = vmatprep.subr.mxu0 0.0
      %2319 = vmatpush2.msra.mxu0 0.0
      %2320 = vmatprep.subr.mxu0 0.0
      %2321 = vmatpush2.msra.mxu0 0.0
      %2322 = vmatprep.subr.mxu0 0.0
      %2323 = vmatpush2.msra.mxu0 0.0
      %2324 = vmatprep.subr.mxu0 0.0
      %2325 = vmatpush2.msra.mxu0 0.0
      %2326 = vmatprep.subr.mxu0 0.0
      %2327 = vmatpush2.msra.mxu0 0.0
      %2328 = vmatprep.subr.mxu0 0.0
      %2329 = vmatpush2.msra.mxu0 0.0
      %2330 = vmatprep.subr.mxu0 0.0
      %2331 = vmatpush2.msra.mxu0 0.0
      %2332 = vmatprep.subr.mxu0 0.0
      %2333 = vmatpush2.msra.mxu0 0.0
      %2334 = vmatprep.subr.mxu0 0.0
      %2335 = vmatpush2.msra.mxu0 0.0
      %2336 = vmatprep.subr.mxu0 0.0
      %2337 = vmatpush2.msra.mxu0 0.0
      %2338 = vmatprep.subr.mxu0 0.0
      %2339 = vmatpush2.msra.mxu0 0.0
      %2340 = vmatprep.subr.mxu0 0.0
      %2341 = vmatpush2.msra.mxu0 0.0
      %2342 = vmatprep.subr.mxu0 0.0
      %2343 = vmatpush2.msra.mxu0 0.0
      %2344 = vmatprep.subr.mxu0 0.0
      %2345 = vmatpush2.msra.mxu0 0.0
      %2346 = vmatprep.subr.mxu0 0.0
      %2347 = vmatpush2.msra.mxu0 0.0
      %2348 = vmatprep.subr.mxu0 0.0
      %2349 = vmatpush2.msra.mxu0 0.0
      %2350 = vmatprep.mubr.f32.mxu0 0.0
      %2351 = vmatmul.mubr.f32.gmra.mxu0 %v1792
      %v2352 = vpop.f32.mrf.mxu0
      %v2353 = vadd.f32 %v1788, %v2352
      %v2354 = vpop.f32.mrf.mxu0
      %v2355 = vadd.f32 %v1788, %v2354
      %2356 = vdwg.mxu0
      %2357 = vmatprep.subr.mxu0 0.0
      %2358 = vmatpush1.msra.mxu0 0.0
      %2359 = vmatprep.subr.mxu0 0.0
      %2360 = vmatpush1.msra.mxu0 0.0
      %2361 = vmatprep.subr.mxu0 0.0
      %2362 = vmatpush1.msra.mxu0 0.0
      %2363 = vmatprep.subr.mxu0 0.0
      %2364 = vmatpush1.msra.mxu0 0.0
      %2365 = vmatprep.subr.mxu0 0.0
      %2366 = vmatpush1.msra.mxu0 0.0
      %2367 = vmatprep.subr.mxu0 0.0
      %2368 = vmatpush1.msra.mxu0 0.0
      %2369 = vmatprep.subr.mxu0 0.0
      %2370 = vmatpush1.msra.mxu0 0.0
      %2371 = vmatprep.subr.mxu0 0.0
      %2372 = vmatpush1.msra.mxu0 0.0
      %2373 = vmatprep.subr.mxu0 0.0
      %2374 = vmatpush1.msra.mxu0 0.0
      %2375 = vmatprep.subr.mxu0 0.0
      %2376 = vmatpush1.msra.mxu0 0.0
      %2377 = vmatprep.subr.mxu0 0.0
      %2378 = vmatpush1.msra.mxu0 0.0
      %2379 = vmatprep.subr.mxu0 0.0
      %2380 = vmatpush1.msra.mxu0 0.0
      %2381 = vmatprep.subr.mxu0 %v1824
      %2382 = vmatpush1.msra.mxu0 %v1822
      %2383 = vmatprep.subr.mxu0 %v1765
      %2384 = vmatpush1.msra.mxu0 %v1764
      %2385 = vmatprep.subr.mxu0 %v1697
      %2386 = vmatpush1.msra.mxu0 %v1696
      %2387 = vmatprep.subr.mxu0 %v1595
      %2388 = vmatpush1.msra.mxu0 %v1594
      %2389 = vmatprep.subr.mxu0 0.0
      %2390 = vmatpush2.msra.mxu0 0.0
      %2391 = vmatprep.subr.mxu0 0.0
      %2392 = vmatpush2.msra.mxu0 0.0
      %2393 = vmatprep.subr.mxu0 0.0
      %2394 = vmatpush2.msra.mxu0 0.0
      %2395 = vmatprep.subr.mxu0 0.0
      %2396 = vmatpush2.msra.mxu0 0.0
      %2397 = vmatprep.subr.mxu0 0.0
      %2398 = vmatpush2.msra.mxu0 0.0
      %2399 = vmatprep.subr.mxu0 0.0
      %2400 = vmatpush2.msra.mxu0 0.0
      %2401 = vmatprep.subr.mxu0 0.0
      %2402 = vmatpush2.msra.mxu0 0.0
      %2403 = vmatprep.subr.mxu0 0.0
      %2404 = vmatpush2.msra.mxu0 0.0
      %2405 = vmatprep.subr.mxu0 0.0
      %2406 = vmatpush2.msra.mxu0 0.0
      %2407 = vmatprep.subr.mxu0 0.0
      %2408 = vmatpush2.msra.mxu0 0.0
      %2409 = vmatprep.subr.mxu0 0.0
      %2410 = vmatpush2.msra.mxu0 0.0
      %2411 = vmatprep.subr.mxu0 0.0
      %2412 = vmatpush2.msra.mxu0 0.0
      %2413 = vmatprep.subr.mxu0 0.0
      %2414 = vmatpush2.msra.mxu0 0.0
      %2415 = vmatprep.subr.mxu0 0.0
      %2416 = vmatpush2.msra.mxu0 0.0
      %2417 = vmatprep.subr.mxu0 0.0
      %2418 = vmatpush2.msra.mxu0 0.0
      %2419 = vmatprep.subr.mxu0 0.0
      %2420 = vmatpush2.msra.mxu0 0.0
      %2421 = vmatprep.mubr.f32.mxu0 0.0
      %2422 = vmatmul.mubr.f32.gmra.mxu0 %v1792
      %v2423 = vpop.f32.mrf.mxu0
      %v2424 = vadd.f32 %v1788, %v2423
      %v2425 = vpop.f32.mrf.mxu0
      %v2426 = vadd.f32 %v1788, %v2425
      %2427 = vdwg.mxu0
      %2428 = vmatprep.subr.mxu0 0.0
      %2429 = vmatpush1.msra.mxu0 0.0
      %2430 = vmatprep.subr.mxu0 0.0
      %2431 = vmatpush1.msra.mxu0 0.0
      %2432 = vmatprep.subr.mxu0 0.0
      %2433 = vmatpush1.msra.mxu0 0.0
      %2434 = vmatprep.subr.mxu0 0.0
      %2435 = vmatpush1.msra.mxu0 0.0
      %2436 = vmatprep.subr.mxu0 0.0
      %2437 = vmatpush1.msra.mxu0 0.0
      %2438 = vmatprep.subr.mxu0 0.0
      %2439 = vmatpush1.msra.mxu0 0.0
      %2440 = vmatprep.subr.mxu0 0.0
      %2441 = vmatpush1.msra.mxu0 0.0
      %2442 = vmatprep.subr.mxu0 0.0
      %2443 = vmatpush1.msra.mxu0 0.0
      %2444 = vmatprep.subr.mxu0 0.0
      %2445 = vmatpush1.msra.mxu0 0.0
      %2446 = vmatprep.subr.mxu0 0.0
      %2447 = vmatpush1.msra.mxu0 0.0
      %2448 = vmatprep.subr.mxu0 0.0
      %2449 = vmatpush1.msra.mxu0 0.0
      %2450 = vmatprep.subr.mxu0 0.0
      %2451 = vmatpush1.msra.mxu0 0.0
      %2452 = vmatprep.subr.mxu0 %v1828
      %2453 = vmatpush1.msra.mxu0 %v1826
      %2454 = vmatprep.subr.mxu0 %v1767
      %2455 = vmatpush1.msra.mxu0 %v1766
      %2456 = vmatprep.subr.mxu0 %v1699
      %2457 = vmatpush1.msra.mxu0 %v1698
      %2458 = vmatprep.subr.mxu0 %v1597
      %2459 = vmatpush1.msra.mxu0 %v1596
      %2460 = vmatprep.subr.mxu0 0.0
      %2461 = vmatpush2.msra.mxu0 0.0
      %2462 = vmatprep.subr.mxu0 0.0
      %2463 = vmatpush2.msra.mxu0 0.0
      %2464 = vmatprep.subr.mxu0 0.0
      %2465 = vmatpush2.msra.mxu0 0.0
      %2466 = vmatprep.subr.mxu0 0.0
      %2467 = vmatpush2.msra.mxu0 0.0
      %2468 = vmatprep.subr.mxu0 0.0
      %2469 = vmatpush2.msra.mxu0 0.0
      %2470 = vmatprep.subr.mxu0 0.0
      %2471 = vmatpush2.msra.mxu0 0.0
      %2472 = vmatprep.subr.mxu0 0.0
      %2473 = vmatpush2.msra.mxu0 0.0
      %2474 = vmatprep.subr.mxu0 0.0
      %2475 = vmatpush2.msra.mxu0 0.0
      %2476 = vmatprep.subr.mxu0 0.0
      %2477 = vmatpush2.msra.mxu0 0.0
      %2478 = vmatprep.subr.mxu0 0.0
      %2479 = vmatpush2.msra.mxu0 0.0
      %2480 = vmatprep.subr.mxu0 0.0
      %2481 = vmatpush2.msra.mxu0 0.0
      %2482 = vmatprep.subr.mxu0 0.0
      %2483 = vmatpush2.msra.mxu0 0.0
      %2484 = vmatprep.subr.mxu0 0.0
      %2485 = vmatpush2.msra.mxu0 0.0
      %2486 = vmatprep.subr.mxu0 0.0
      %2487 = vmatpush2.msra.mxu0 0.0
      %2488 = vmatprep.subr.mxu0 0.0
      %2489 = vmatpush2.msra.mxu0 0.0
      %2490 = vmatprep.subr.mxu0 0.0
      %2491 = vmatpush2.msra.mxu0 0.0
      %2492 = vmatprep.mubr.f32.mxu0 0.0
      %2493 = vmatmul.mubr.f32.gmra.mxu0 %v1792
      %v2494 = vpop.f32.mrf.mxu0
      %v2495 = vadd.f32 %v1788, %v2494
      %v2496 = vpop.f32.mrf.mxu0
      %v2497 = vadd.f32 %v1788, %v2496
      %2498 = vdwg.mxu0
      %2499 = vmatprep.subr.mxu0 0.0
      %2500 = vmatpush1.msra.mxu0 0.0
      %2501 = vmatprep.subr.mxu0 0.0
      %2502 = vmatpush1.msra.mxu0 0.0
      %2503 = vmatprep.subr.mxu0 0.0
      %2504 = vmatpush1.msra.mxu0 0.0
      %2505 = vmatprep.subr.mxu0 0.0
      %2506 = vmatpush1.msra.mxu0 0.0
      %2507 = vmatprep.subr.mxu0 0.0
      %2508 = vmatpush1.msra.mxu0 0.0
      %2509 = vmatprep.subr.mxu0 0.0
      %2510 = vmatpush1.msra.mxu0 0.0
      %2511 = vmatprep.subr.mxu0 0.0
      %2512 = vmatpush1.msra.mxu0 0.0
      %2513 = vmatprep.subr.mxu0 0.0
      %2514 = vmatpush1.msra.mxu0 0.0
      %2515 = vmatprep.subr.mxu0 0.0
      %2516 = vmatpush1.msra.mxu0 0.0
      %2517 = vmatprep.subr.mxu0 0.0
      %2518 = vmatpush1.msra.mxu0 0.0
      %2519 = vmatprep.subr.mxu0 0.0
      %2520 = vmatpush1.msra.mxu0 0.0
      %2521 = vmatprep.subr.mxu0 0.0
      %2522 = vmatpush1.msra.mxu0 0.0
      %2523 = vmatprep.subr.mxu0 %v1832
      %2524 = vmatpush1.msra.mxu0 %v1830
      %2525 = vmatprep.subr.mxu0 %v1769
      %2526 = vmatpush1.msra.mxu0 %v1768
      %2527 = vmatprep.subr.mxu0 %v1701
      %2528 = vmatpush1.msra.mxu0 %v1700
      %2529 = vmatprep.subr.mxu0 %v1599
      %2530 = vmatpush1.msra.mxu0 %v1598
      %2531 = vmatprep.subr.mxu0 0.0
      %2532 = vmatpush2.msra.mxu0 0.0
      %2533 = vmatprep.subr.mxu0 0.0
      %2534 = vmatpush2.msra.mxu0 0.0
      %2535 = vmatprep.subr.mxu0 0.0
      %2536 = vmatpush2.msra.mxu0 0.0
      %2537 = vmatprep.subr.mxu0 0.0
      %2538 = vmatpush2.msra.mxu0 0.0
      %2539 = vmatprep.subr.mxu0 0.0
      %2540 = vmatpush2.msra.mxu0 0.0
      %2541 = vmatprep.subr.mxu0 0.0
      %2542 = vmatpush2.msra.mxu0 0.0
      %2543 = vmatprep.subr.mxu0 0.0
      %2544 = vmatpush2.msra.mxu0 0.0
      %2545 = vmatprep.subr.mxu0 0.0
      %2546 = vmatpush2.msra.mxu0 0.0
      %2547 = vmatprep.subr.mxu0 0.0
      %2548 = vmatpush2.msra.mxu0 0.0
      %2549 = vmatprep.subr.mxu0 0.0
      %2550 = vmatpush2.msra.mxu0 0.0
      %2551 = vmatprep.subr.mxu0 0.0
      %2552 = vmatpush2.msra.mxu0 0.0
      %2553 = vmatprep.subr.mxu0 0.0
      %2554 = vmatpush2.msra.mxu0 0.0
      %2555 = vmatprep.subr.mxu0 0.0
      %2556 = vmatpush2.msra.mxu0 0.0
      %2557 = vmatprep.subr.mxu0 0.0
      %2558 = vmatpush2.msra.mxu0 0.0
      %2559 = vmatprep.subr.mxu0 0.0
      %2560 = vmatpush2.msra.mxu0 0.0
      %2561 = vmatprep.subr.mxu0 0.0
      %2562 = vmatpush2.msra.mxu0 0.0
      %2563 = vmatprep.mubr.f32.mxu0 0.0
      %2564 = vmatmul.mubr.f32.gmra.mxu0 %v1792
      %v2565 = vpop.f32.mrf.mxu0
      %v2566 = vadd.f32 %v1788, %v2565
      %v2567 = vpop.f32.mrf.mxu0
      %v2568 = vadd.f32 %v1788, %v2567
      %2569 = vdwg.mxu0
      %2570 = vmatprep.subr.mxu0 0.0
      %2571 = vmatpush1.msra.mxu0 0.0
      %2572 = vmatprep.subr.mxu0 0.0
      %2573 = vmatpush1.msra.mxu0 0.0
      %2574 = vmatprep.subr.mxu0 0.0
      %2575 = vmatpush1.msra.mxu0 0.0
      %2576 = vmatprep.subr.mxu0 0.0
      %2577 = vmatpush1.msra.mxu0 0.0
      %2578 = vmatprep.subr.mxu0 0.0
      %2579 = vmatpush1.msra.mxu0 0.0
      %2580 = vmatprep.subr.mxu0 0.0
      %2581 = vmatpush1.msra.mxu0 0.0
      %2582 = vmatprep.subr.mxu0 0.0
      %2583 = vmatpush1.msra.mxu0 0.0
      %2584 = vmatprep.subr.mxu0 0.0
      %2585 = vmatpush1.msra.mxu0 0.0
      %2586 = vmatprep.subr.mxu0 0.0
      %2587 = vmatpush1.msra.mxu0 0.0
      %2588 = vmatprep.subr.mxu0 0.0
      %2589 = vmatpush1.msra.mxu0 0.0
      %2590 = vmatprep.subr.mxu0 0.0
      %2591 = vmatpush1.msra.mxu0 0.0
      %2592 = vmatprep.subr.mxu0 0.0
      %2593 = vmatpush1.msra.mxu0 0.0
      %2594 = vmatprep.subr.mxu0 %v1836
      %2595 = vmatpush1.msra.mxu0 %v1834
      %2596 = vmatprep.subr.mxu0 %v1771
      %2597 = vmatpush1.msra.mxu0 %v1770
      %2598 = vmatprep.subr.mxu0 %v1703
      %2599 = vmatpush1.msra.mxu0 %v1702
      %2600 = vmatprep.subr.mxu0 %v1601
      %2601 = vmatpush1.msra.mxu0 %v1600
      %2602 = vmatprep.subr.mxu0 0.0
      %2603 = vmatpush2.msra.mxu0 0.0
      %2604 = vmatprep.subr.mxu0 0.0
      %2605 = vmatpush2.msra.mxu0 0.0
      %2606 = vmatprep.subr.mxu0 0.0
      %2607 = vmatpush2.msra.mxu0 0.0
      %2608 = vmatprep.subr.mxu0 0.0
      %2609 = vmatpush2.msra.mxu0 0.0
      %2610 = vmatprep.subr.mxu0 0.0
      %2611 = vmatpush2.msra.mxu0 0.0
      %2612 = vmatprep.subr.mxu0 0.0
      %2613 = vmatpush2.msra.mxu0 0.0
      %2614 = vmatprep.subr.mxu0 0.0
      %2615 = vmatpush2.msra.mxu0 0.0
      %2616 = vmatprep.subr.mxu0 0.0
      %2617 = vmatpush2.msra.mxu0 0.0
      %2618 = vmatprep.subr.mxu0 0.0
      %2619 = vmatpush2.msra.mxu0 0.0
      %2620 = vmatprep.subr.mxu0 0.0
      %2621 = vmatpush2.msra.mxu0 0.0
      %2622 = vmatprep.subr.mxu0 0.0
      %2623 = vmatpush2.msra.mxu0 0.0
      %2624 = vmatprep.subr.mxu0 0.0
      %2625 = vmatpush2.msra.mxu0 0.0
      %2626 = vmatprep.subr.mxu0 0.0
      %2627 = vmatpush2.msra.mxu0 0.0
      %2628 = vmatprep.subr.mxu0 0.0
      %2629 = vmatpush2.msra.mxu0 0.0
      %2630 = vmatprep.subr.mxu0 0.0
      %2631 = vmatpush2.msra.mxu0 0.0
      %2632 = vmatprep.subr.mxu0 0.0
      %2633 = vmatpush2.msra.mxu0 0.0
      %2634 = vmatprep.mubr.f32.mxu0 0.0
      %2635 = vmatmul.mubr.f32.gmra.mxu0 %v1792
      %v2636 = vpop.f32.mrf.mxu0
      %v2637 = vadd.f32 %v1788, %v2636
      %v2638 = vpop.f32.mrf.mxu0
      %v2639 = vadd.f32 %v1788, %v2638
      %2640 = vdwg.mxu0
      %2641 = vmatprep.subr.mxu0 0.0
      %2642 = vmatpush1.msra.mxu0 0.0
      %2643 = vmatprep.subr.mxu0 0.0
      %2644 = vmatpush1.msra.mxu0 0.0
      %2645 = vmatprep.subr.mxu0 0.0
      %2646 = vmatpush1.msra.mxu0 0.0
      %2647 = vmatprep.subr.mxu0 0.0
      %2648 = vmatpush1.msra.mxu0 0.0
      %2649 = vmatprep.subr.mxu0 0.0
      %2650 = vmatpush1.msra.mxu0 0.0
      %2651 = vmatprep.subr.mxu0 0.0
      %2652 = vmatpush1.msra.mxu0 0.0
      %2653 = vmatprep.subr.mxu0 0.0
      %2654 = vmatpush1.msra.mxu0 0.0
      %2655 = vmatprep.subr.mxu0 0.0
      %2656 = vmatpush1.msra.mxu0 0.0
      %2657 = vmatprep.subr.mxu0 0.0
      %2658 = vmatpush1.msra.mxu0 0.0
      %2659 = vmatprep.subr.mxu0 0.0
      %2660 = vmatpush1.msra.mxu0 0.0
      %2661 = vmatprep.subr.mxu0 0.0
      %2662 = vmatpush1.msra.mxu0 0.0
      %2663 = vmatprep.subr.mxu0 0.0
      %2664 = vmatpush1.msra.mxu0 0.0
      %2665 = vmatprep.subr.mxu0 %v1840
      %2666 = vmatpush1.msra.mxu0 %v1838
      %2667 = vmatprep.subr.mxu0 %v1773
      %2668 = vmatpush1.msra.mxu0 %v1772
      %2669 = vmatprep.subr.mxu0 %v1705
      %2670 = vmatpush1.msra.mxu0 %v1704
      %2671 = vmatprep.subr.mxu0 %v1603
      %2672 = vmatpush1.msra.mxu0 %v1602
      %2673 = vmatprep.subr.mxu0 0.0
      %2674 = vmatpush2.msra.mxu0 0.0
      %2675 = vmatprep.subr.mxu0 0.0
      %2676 = vmatpush2.msra.mxu0 0.0
      %2677 = vmatprep.subr.mxu0 0.0
      %2678 = vmatpush2.msra.mxu0 0.0
      %2679 = vmatprep.subr.mxu0 0.0
      %2680 = vmatpush2.msra.mxu0 0.0
      %2681 = vmatprep.subr.mxu0 0.0
      %2682 = vmatpush2.msra.mxu0 0.0
      %2683 = vmatprep.subr.mxu0 0.0
      %2684 = vmatpush2.msra.mxu0 0.0
      %2685 = vmatprep.subr.mxu0 0.0
      %2686 = vmatpush2.msra.mxu0 0.0
      %2687 = vmatprep.subr.mxu0 0.0
      %2688 = vmatpush2.msra.mxu0 0.0
      %2689 = vmatprep.subr.mxu0 0.0
      %2690 = vmatpush2.msra.mxu0 0.0
      %2691 = vmatprep.subr.mxu0 0.0
      %2692 = vmatpush2.msra.mxu0 0.0
      %2693 = vmatprep.subr.mxu0 0.0
      %2694 = vmatpush2.msra.mxu0 0.0
      %2695 = vmatprep.subr.mxu0 0.0
      %2696 = vmatpush2.msra.mxu0 0.0
      %2697 = vmatprep.subr.mxu0 0.0
      %2698 = vmatpush2.msra.mxu0 0.0
      %2699 = vmatprep.subr.mxu0 0.0
      %2700 = vmatpush2.msra.mxu0 0.0
      %2701 = vmatprep.subr.mxu0 0.0
      %2702 = vmatpush2.msra.mxu0 0.0
      %2703 = vmatprep.subr.mxu0 0.0
      %2704 = vmatpush2.msra.mxu0 0.0
      %2705 = vmatprep.mubr.f32.mxu0 0.0
      %2706 = vmatmul.mubr.f32.gmra.mxu0 %v1792
      %v2707 = vpop.f32.mrf.mxu0
      %v2708 = vadd.f32 %v1788, %v2707
      %v2709 = vpop.f32.mrf.mxu0
      %v2710 = vadd.f32 %v1788, %v2709
      %2711 = vdwg.mxu0
      %2712 = vmatprep.subr.mxu0 0.0
      %2713 = vmatpush1.msra.mxu0 0.0
      %2714 = vmatprep.subr.mxu0 0.0
      %2715 = vmatpush1.msra.mxu0 0.0
      %2716 = vmatprep.subr.mxu0 0.0
      %2717 = vmatpush1.msra.mxu0 0.0
      %2718 = vmatprep.subr.mxu0 0.0
      %2719 = vmatpush1.msra.mxu0 0.0
      %2720 = vmatprep.subr.mxu0 0.0
      %2721 = vmatpush1.msra.mxu0 0.0
      %2722 = vmatprep.subr.mxu0 0.0
      %2723 = vmatpush1.msra.mxu0 0.0
      %2724 = vmatprep.subr.mxu0 0.0
      %2725 = vmatpush1.msra.mxu0 0.0
      %2726 = vmatprep.subr.mxu0 0.0
      %2727 = vmatpush1.msra.mxu0 0.0
      %2728 = vmatprep.subr.mxu0 0.0
      %2729 = vmatpush1.msra.mxu0 0.0
      %2730 = vmatprep.subr.mxu0 0.0
      %2731 = vmatpush1.msra.mxu0 0.0
      %2732 = vmatprep.subr.mxu0 0.0
      %2733 = vmatpush1.msra.mxu0 0.0
      %2734 = vmatprep.subr.mxu0 0.0
      %2735 = vmatpush1.msra.mxu0 0.0
      %2736 = vmatprep.subr.mxu0 %v1844
      %2737 = vmatpush1.msra.mxu0 %v1842
      %2738 = vmatprep.subr.mxu0 %v1775
      %2739 = vmatpush1.msra.mxu0 %v1774
      %2740 = vmatprep.subr.mxu0 %v1707
      %2741 = vmatpush1.msra.mxu0 %v1706
      %2742 = vmatprep.subr.mxu0 %v1605
      %2743 = vmatpush1.msra.mxu0 %v1604
      %2744 = vmatprep.subr.mxu0 0.0
      %2745 = vmatpush2.msra.mxu0 0.0
      %2746 = vmatprep.subr.mxu0 0.0
      %2747 = vmatpush2.msra.mxu0 0.0
      %2748 = vmatprep.subr.mxu0 0.0
      %2749 = vmatpush2.msra.mxu0 0.0
      %2750 = vmatprep.subr.mxu0 0.0
      %2751 = vmatpush2.msra.mxu0 0.0
      %2752 = vmatprep.subr.mxu0 0.0
      %2753 = vmatpush2.msra.mxu0 0.0
      %2754 = vmatprep.subr.mxu0 0.0
      %2755 = vmatpush2.msra.mxu0 0.0
      %2756 = vmatprep.subr.mxu0 0.0
      %2757 = vmatpush2.msra.mxu0 0.0
      %2758 = vmatprep.subr.mxu0 0.0
      %2759 = vmatpush2.msra.mxu0 0.0
      %2760 = vmatprep.subr.mxu0 0.0
      %2761 = vmatpush2.msra.mxu0 0.0
      %2762 = vmatprep.subr.mxu0 0.0
      %2763 = vmatpush2.msra.mxu0 0.0
      %2764 = vmatprep.subr.mxu0 0.0
      %2765 = vmatpush2.msra.mxu0 0.0
      %2766 = vmatprep.subr.mxu0 0.0
      %2767 = vmatpush2.msra.mxu0 0.0
      %2768 = vmatprep.subr.mxu0 0.0
      %2769 = vmatpush2.msra.mxu0 0.0
      %2770 = vmatprep.subr.mxu0 0.0
      %2771 = vmatpush2.msra.mxu0 0.0
      %2772 = vmatprep.subr.mxu0 0.0
      %2773 = vmatpush2.msra.mxu0 0.0
      %2774 = vmatprep.subr.mxu0 0.0
      %2775 = vmatpush2.msra.mxu0 0.0
      %2776 = vmatprep.mubr.f32.mxu0 0.0
      %2777 = vmatmul.mubr.f32.gmra.mxu0 %v1792
      %v2778 = vpop.f32.mrf.mxu0
      %v2779 = vadd.f32 %v1788, %v2778
      %v2780 = vpop.f32.mrf.mxu0
      %v2781 = vadd.f32 %v1788, %v2780
      %2782 = vdwg.mxu0
      %2783 = vmatprep.subr.mxu0 0.0
      %2784 = vmatpush1.msra.mxu0 0.0
      %2785 = vmatprep.subr.mxu0 0.0
      %2786 = vmatpush1.msra.mxu0 0.0
      %2787 = vmatprep.subr.mxu0 0.0
      %2788 = vmatpush1.msra.mxu0 0.0
      %2789 = vmatprep.subr.mxu0 0.0
      %2790 = vmatpush1.msra.mxu0 0.0
      %2791 = vmatprep.subr.mxu0 0.0
      %2792 = vmatpush1.msra.mxu0 0.0
      %2793 = vmatprep.subr.mxu0 0.0
      %2794 = vmatpush1.msra.mxu0 0.0
      %2795 = vmatprep.subr.mxu0 0.0
      %2796 = vmatpush1.msra.mxu0 0.0
      %2797 = vmatprep.subr.mxu0 0.0
      %2798 = vmatpush1.msra.mxu0 0.0
      %2799 = vmatprep.subr.mxu0 0.0
      %2800 = vmatpush1.msra.mxu0 0.0
      %2801 = vmatprep.subr.mxu0 0.0
      %2802 = vmatpush1.msra.mxu0 0.0
      %2803 = vmatprep.subr.mxu0 0.0
      %2804 = vmatpush1.msra.mxu0 0.0
      %2805 = vmatprep.subr.mxu0 0.0
      %2806 = vmatpush1.msra.mxu0 0.0
      %2807 = vmatprep.subr.mxu0 %v1848
      %2808 = vmatpush1.msra.mxu0 %v1846
      %2809 = vmatprep.subr.mxu0 %v1777
      %2810 = vmatpush1.msra.mxu0 %v1776
      %2811 = vmatprep.subr.mxu0 %v1709
      %2812 = vmatpush1.msra.mxu0 %v1708
      %2813 = vmatprep.subr.mxu0 %v1607
      %2814 = vmatpush1.msra.mxu0 %v1606
      %2815 = vmatprep.subr.mxu0 0.0
      %2816 = vmatpush2.msra.mxu0 0.0
      %2817 = vmatprep.subr.mxu0 0.0
      %2818 = vmatpush2.msra.mxu0 0.0
      %2819 = vmatprep.subr.mxu0 0.0
      %2820 = vmatpush2.msra.mxu0 0.0
      %2821 = vmatprep.subr.mxu0 0.0
      %2822 = vmatpush2.msra.mxu0 0.0
      %2823 = vmatprep.subr.mxu0 0.0
      %2824 = vmatpush2.msra.mxu0 0.0
      %2825 = vmatprep.subr.mxu0 0.0
      %2826 = vmatpush2.msra.mxu0 0.0
      %2827 = vmatprep.subr.mxu0 0.0
      %2828 = vmatpush2.msra.mxu0 0.0
      %2829 = vmatprep.subr.mxu0 0.0
      %2830 = vmatpush2.msra.mxu0 0.0
      %2831 = vmatprep.subr.mxu0 0.0
      %2832 = vmatpush2.msra.mxu0 0.0
      %2833 = vmatprep.subr.mxu0 0.0
      %2834 = vmatpush2.msra.mxu0 0.0
      %2835 = vmatprep.subr.mxu0 0.0
      %2836 = vmatpush2.msra.mxu0 0.0
      %2837 = vmatprep.subr.mxu0 0.0
      %2838 = vmatpush2.msra.mxu0 0.0
      %2839 = vmatprep.subr.mxu0 0.0
      %2840 = vmatpush2.msra.mxu0 0.0
      %2841 = vmatprep.subr.mxu0 0.0
      %2842 = vmatpush2.msra.mxu0 0.0
      %2843 = vmatprep.subr.mxu0 0.0
      %2844 = vmatpush2.msra.mxu0 0.0
      %2845 = vmatprep.subr.mxu0 0.0
      %2846 = vmatpush2.msra.mxu0 0.0
      %2847 = vmatprep.mubr.f32.mxu0 0.0
      %2848 = vmatmul.mubr.f32.gmra.mxu0 %v1792
      %v2849 = vpop.f32.mrf.mxu0
      %v2850 = vadd.f32 %v1788, %v2849
      %v2851 = vpop.f32.mrf.mxu0
      %v2852 = vadd.f32 %v1788, %v2851
      %2853 = vdwg.mxu0
      %2854 = vmatprep.subr.mxu0 0.0
      %2855 = vmatpush1.msra.mxu0 0.0
      %2856 = vmatprep.subr.mxu0 0.0
      %2857 = vmatpush1.msra.mxu0 0.0
      %2858 = vmatprep.subr.mxu0 0.0
      %2859 = vmatpush1.msra.mxu0 0.0
      %2860 = vmatprep.subr.mxu0 0.0
      %2861 = vmatpush1.msra.mxu0 0.0
      %2862 = vmatprep.subr.mxu0 0.0
      %2863 = vmatpush1.msra.mxu0 0.0
      %2864 = vmatprep.subr.mxu0 0.0
      %2865 = vmatpush1.msra.mxu0 0.0
      %2866 = vmatprep.subr.mxu0 0.0
      %2867 = vmatpush1.msra.mxu0 0.0
      %2868 = vmatprep.subr.mxu0 0.0
      %2869 = vmatpush1.msra.mxu0 0.0
      %2870 = vmatprep.subr.mxu0 0.0
      %2871 = vmatpush1.msra.mxu0 0.0
      %2872 = vmatprep.subr.mxu0 0.0
      %2873 = vmatpush1.msra.mxu0 0.0
      %2874 = vmatprep.subr.mxu0 0.0
      %2875 = vmatpush1.msra.mxu0 0.0
      %2876 = vmatprep.subr.mxu0 0.0
      %2877 = vmatpush1.msra.mxu0 0.0
      %2878 = vmatprep.subr.mxu0 %v1852
      %2879 = vmatpush1.msra.mxu0 %v1850
      %2880 = vmatprep.subr.mxu0 %v1779
      %2881 = vmatpush1.msra.mxu0 %v1778
      %2882 = vmatprep.subr.mxu0 %v1711
      %2883 = vmatpush1.msra.mxu0 %v1710
      %2884 = vmatprep.subr.mxu0 %v1609
      %2885 = vmatpush1.msra.mxu0 %v1608
      %2886 = vmatprep.subr.mxu0 0.0
      %2887 = vmatpush2.msra.mxu0 0.0
      %2888 = vmatprep.subr.mxu0 0.0
      %2889 = vmatpush2.msra.mxu0 0.0
      %2890 = vmatprep.subr.mxu0 0.0
      %2891 = vmatpush2.msra.mxu0 0.0
      %2892 = vmatprep.subr.mxu0 0.0
      %2893 = vmatpush2.msra.mxu0 0.0
      %2894 = vmatprep.subr.mxu0 0.0
      %2895 = vmatpush2.msra.mxu0 0.0
      %2896 = vmatprep.subr.mxu0 0.0
      %2897 = vmatpush2.msra.mxu0 0.0
      %2898 = vmatprep.subr.mxu0 0.0
      %2899 = vmatpush2.msra.mxu0 0.0
      %2900 = vmatprep.subr.mxu0 0.0
      %2901 = vmatpush2.msra.mxu0 0.0
      %2902 = vmatprep.subr.mxu0 0.0
      %2903 = vmatpush2.msra.mxu0 0.0
      %2904 = vmatprep.subr.mxu0 0.0
      %2905 = vmatpush2.msra.mxu0 0.0
      %2906 = vmatprep.subr.mxu0 0.0
      %2907 = vmatpush2.msra.mxu0 0.0
      %2908 = vmatprep.subr.mxu0 0.0
      %2909 = vmatpush2.msra.mxu0 0.0
      %2910 = vmatprep.subr.mxu0 0.0
      %2911 = vmatpush2.msra.mxu0 0.0
      %2912 = vmatprep.subr.mxu0 0.0
      %2913 = vmatpush2.msra.mxu0 0.0
      %2914 = vmatprep.subr.mxu0 0.0
      %2915 = vmatpush2.msra.mxu0 0.0
      %2916 = vmatprep.subr.mxu0 0.0
      %2917 = vmatpush2.msra.mxu0 0.0
      %2918 = vmatprep.mubr.f32.mxu0 0.0
      %2919 = vmatmul.mubr.f32.gmra.mxu0 %v1792
      %v2920 = vpop.f32.mrf.mxu0
      %v2921 = vadd.f32 %v1788, %v2920
      %v2922 = vpop.f32.mrf.mxu0
      %v2923 = vadd.f32 %v1788, %v2922
      %2924 = vdwg.mxu0
      %2925 = vmatprep.subr.mxu0 0.0
      %2926 = vmatpush1.msra.mxu0 0.0
      %2927 = vmatprep.subr.mxu0 0.0
      %2928 = vmatpush1.msra.mxu0 0.0
      %2929 = vmatprep.subr.mxu0 0.0
      %2930 = vmatpush1.msra.mxu0 0.0
      %2931 = vmatprep.subr.mxu0 0.0
      %2932 = vmatpush1.msra.mxu0 0.0
      %2933 = vmatprep.subr.mxu0 0.0
      %2934 = vmatpush1.msra.mxu0 0.0
      %2935 = vmatprep.subr.mxu0 0.0
      %2936 = vmatpush1.msra.mxu0 0.0
      %2937 = vmatprep.subr.mxu0 0.0
      %2938 = vmatpush1.msra.mxu0 0.0
      %2939 = vmatprep.subr.mxu0 0.0
      %2940 = vmatpush1.msra.mxu0 0.0
      %2941 = vmatprep.subr.mxu0 0.0
      %2942 = vmatpush1.msra.mxu0 0.0
      %2943 = vmatprep.subr.mxu0 0.0
      %2944 = vmatpush1.msra.mxu0 0.0
      %2945 = vmatprep.subr.mxu0 0.0
      %2946 = vmatpush1.msra.mxu0 0.0
      %2947 = vmatprep.subr.mxu0 0.0
      %2948 = vmatpush1.msra.mxu0 0.0
      %2949 = vmatprep.subr.mxu0 %v1856
      %2950 = vmatpush1.msra.mxu0 %v1854
      %2951 = vmatprep.subr.mxu0 %v1781
      %2952 = vmatpush1.msra.mxu0 %v1780
      %2953 = vmatprep.subr.mxu0 %v1713
      %2954 = vmatpush1.msra.mxu0 %v1712
      %2955 = vmatprep.subr.mxu0 %v1611
      %2956 = vmatpush1.msra.mxu0 %v1610
      %2957 = vmatprep.subr.mxu0 0.0
      %2958 = vmatpush2.msra.mxu0 0.0
      %2959 = vmatprep.subr.mxu0 0.0
      %2960 = vmatpush2.msra.mxu0 0.0
      %2961 = vmatprep.subr.mxu0 0.0
      %2962 = vmatpush2.msra.mxu0 0.0
      %2963 = vmatprep.subr.mxu0 0.0
      %2964 = vmatpush2.msra.mxu0 0.0
      %2965 = vmatprep.subr.mxu0 0.0
      %2966 = vmatpush2.msra.mxu0 0.0
      %2967 = vmatprep.subr.mxu0 0.0
      %2968 = vmatpush2.msra.mxu0 0.0
      %2969 = vmatprep.subr.mxu0 0.0
      %2970 = vmatpush2.msra.mxu0 0.0
      %2971 = vmatprep.subr.mxu0 0.0
      %2972 = vmatpush2.msra.mxu0 0.0
      %2973 = vmatprep.subr.mxu0 0.0
      %2974 = vmatpush2.msra.mxu0 0.0
      %2975 = vmatprep.subr.mxu0 0.0
      %2976 = vmatpush2.msra.mxu0 0.0
      %2977 = vmatprep.subr.mxu0 0.0
      %2978 = vmatpush2.msra.mxu0 0.0
      %2979 = vmatprep.subr.mxu0 0.0
      %2980 = vmatpush2.msra.mxu0 0.0
      %2981 = vmatprep.subr.mxu0 0.0
      %2982 = vmatpush2.msra.mxu0 0.0
      %2983 = vmatprep.subr.mxu0 0.0
      %2984 = vmatpush2.msra.mxu0 0.0
      %2985 = vmatprep.subr.mxu0 0.0
      %2986 = vmatpush2.msra.mxu0 0.0
      %2987 = vmatprep.subr.mxu0 0.0
      %2988 = vmatpush2.msra.mxu0 0.0
      %2989 = vmatprep.mubr.f32.mxu0 0.0
      %2990 = vmatmul.mubr.f32.gmra.mxu0 %v1792
      %v2991 = vpop.f32.mrf.mxu0
      %v2992 = vadd.f32 %v1788, %v2991
      %v2993 = vpop.f32.mrf.mxu0
      %v2994 = vadd.f32 %v1788, %v2993
      %2995 = vdwg.mxu0
      %2996 = vmatprep.subr.mxu0 0.0
      %2997 = vmatpush1.msra.mxu0 0.0
      %2998 = vmatprep.subr.mxu0 0.0
      %2999 = vmatpush1.msra.mxu0 0.0
      %3000 = vmatprep.subr.mxu0 0.0
      %3001 = vmatpush1.msra.mxu0 0.0
      %3002 = vmatprep.subr.mxu0 0.0
      %3003 = vmatpush1.msra.mxu0 0.0
      %3004 = vmatprep.subr.mxu0 0.0
      %3005 = vmatpush1.msra.mxu0 0.0
      %3006 = vmatprep.subr.mxu0 0.0
      %3007 = vmatpush1.msra.mxu0 0.0
      %3008 = vmatprep.subr.mxu0 0.0
      %3009 = vmatpush1.msra.mxu0 0.0
      %3010 = vmatprep.subr.mxu0 0.0
      %3011 = vmatpush1.msra.mxu0 0.0
      %3012 = vmatprep.subr.mxu0 0.0
      %3013 = vmatpush1.msra.mxu0 0.0
      %3014 = vmatprep.subr.mxu0 0.0
      %3015 = vmatpush1.msra.mxu0 0.0
      %3016 = vmatprep.subr.mxu0 0.0
      %3017 = vmatpush1.msra.mxu0 0.0
      %3018 = vmatprep.subr.mxu0 0.0
      %3019 = vmatpush1.msra.mxu0 0.0
      %3020 = vmatprep.subr.mxu0 0.0
      %3021 = vmatpush1.msra.mxu0 %v1858
      %3022 = vmatprep.subr.mxu0 0.0
      %3023 = vmatpush1.msra.mxu0 %v1782
      %3024 = vmatprep.subr.mxu0 0.0
      %3025 = vmatpush1.msra.mxu0 %v1714
      %3026 = vmatprep.subr.mxu0 0.0
      %3027 = vmatpush1.msra.mxu0 %v1612
      %3028 = vmatprep.subr.mxu0 0.0
      %3029 = vmatpush2.msra.mxu0 0.0
      %3030 = vmatprep.subr.mxu0 0.0
      %3031 = vmatpush2.msra.mxu0 0.0
      %3032 = vmatprep.subr.mxu0 0.0
      %3033 = vmatpush2.msra.mxu0 0.0
      %3034 = vmatprep.subr.mxu0 0.0
      %3035 = vmatpush2.msra.mxu0 0.0
      %3036 = vmatprep.subr.mxu0 0.0
      %3037 = vmatpush2.msra.mxu0 0.0
      %3038 = vmatprep.subr.mxu0 0.0
      %3039 = vmatpush2.msra.mxu0 0.0
      %3040 = vmatprep.subr.mxu0 0.0
      %3041 = vmatpush2.msra.mxu0 0.0
      %3042 = vmatprep.subr.mxu0 0.0
      %3043 = vmatpush2.msra.mxu0 0.0
      %3044 = vmatprep.subr.mxu0 0.0
      %3045 = vmatpush2.msra.mxu0 0.0
      %3046 = vmatprep.subr.mxu0 0.0
      %3047 = vmatpush2.msra.mxu0 0.0
      %3048 = vmatprep.subr.mxu0 0.0
      %3049 = vmatpush2.msra.mxu0 0.0
      %3050 = vmatprep.subr.mxu0 0.0
      %3051 = vmatpush2.msra.mxu0 0.0
      %3052 = vmatprep.subr.mxu0 0.0
      %3053 = vmatpush2.msra.mxu0 0.0
      %3054 = vmatprep.subr.mxu0 0.0
      %3055 = vmatpush2.msra.mxu0 0.0
      %3056 = vmatprep.subr.mxu0 0.0
      %3057 = vmatpush2.msra.mxu0 0.0
      %3058 = vmatprep.subr.mxu0 0.0
      %3059 = vmatpush2.msra.mxu0 0.0
      %3060 = vmatprep.mubr.f32.mxu0 0.0
      %3061 = vmatmul.mubr.f32.gmra.mxu0 %v1792
      %v3062 = vpop.f32.mrf.mxu0
      %v3063 = vadd.f32 %v1788, %v3062
      %v3064 = vpop.f32.mrf.mxu0
      %3065 = vdwg.mxu0
      %v3066 = vmax.f32 %v1927, 0.0
      %v3067 = vmax.f32 %v1929, 0.0
      %v3068 = vmax.f32 %v1998, 0.0
      %v3069 = vmax.f32 %v2000, 0.0
      %v3070 = vmax.f32 %v2069, 0.0
      %v3071 = vmax.f32 %v2071, 0.0
      %v3072 = vmax.f32 %v2140, 0.0
      %v3073 = vmax.f32 %v2142, 0.0
      %v3074 = vmax.f32 %v2211, 0.0
      %v3075 = vmax.f32 %v2213, 0.0
      %v3076 = vmax.f32 %v2282, 0.0
      %v3077 = vmax.f32 %v2284, 0.0
      %v3078 = vmax.f32 %v2353, 0.0
      %v3079 = vmax.f32 %v2355, 0.0
      %v3080 = vmax.f32 %v2424, 0.0
      %v3081 = vmax.f32 %v2426, 0.0
      %v3082 = vmax.f32 %v2495, 0.0
      %v3083 = vmax.f32 %v2497, 0.0
      %v3084 = vmax.f32 %v2566, 0.0
      %v3085 = vmax.f32 %v2568, 0.0
      %v3086 = vmax.f32 %v2637, 0.0
      %v3087 = vmax.f32 %v2639, 0.0
      %v3088 = vmax.f32 %v2708, 0.0
      %v3089 = vmax.f32 %v2710, 0.0
      %v3090 = vmax.f32 %v2779, 0.0
      %v3091 = vmax.f32 %v2781, 0.0
      %v3092 = vmax.f32 %v2850, 0.0
      %v3093 = vmax.f32 %v2852, 0.0
      %v3094 = vmax.f32 %v2921, 0.0
      %v3095 = vmax.f32 %v2923, 0.0
      %v3096 = vmax.f32 %v2992, 0.0
      %v3097 = vmax.f32 %v2994, 0.0
      %v3098 = vmax.f32 %v3063, 0.0
      %3099 = vst [vmem:[%s206] sm:$0xff] %v3066
      %3100 = vst [vmem:[%s206 + $0x8] sm:$0xff] %v3067
      %3101 = vst [vmem:[%s206 + $0x10] sm:$0xff] %v3068
      %3102 = vst [vmem:[%s206 + $0x18] sm:$0xff] %v3069
      %3103 = vst [vmem:[%s206 + $0x20] sm:$0xff] %v3070
      %3104 = vst [vmem:[%s206 + $0x28] sm:$0xff] %v3071
      %3105 = vst [vmem:[%s206 + $0x30] sm:$0xff] %v3072
      %3106 = vst [vmem:[%s206 + $0x38] sm:$0xff] %v3073
      %3107 = vst [vmem:[%s206 + $0x40] sm:$0xff] %v3074
      %3108 = vst [vmem:[%s206 + $0x48] sm:$0xff] %v3075
      %3109 = vst [vmem:[%s206 + $0x50] sm:$0xff] %v3076
      %3110 = vst [vmem:[%s206 + $0x58] sm:$0xff] %v3077
      %3111 = vst [vmem:[%s206 + $0x60] sm:$0xff] %v3078
      %3112 = vst [vmem:[%s206 + $0x68] sm:$0xff] %v3079
      %3113 = vst [vmem:[%s206 + $0x70] sm:$0xff] %v3080
      %3114 = vst [vmem:[%s206 + $0x78] sm:$0xff] %v3081
      %3115 = vst [vmem:[%s206 + $0x80] sm:$0xff] %v3082
      %3116 = vst [vmem:[%s206 + $0x88] sm:$0xff] %v3083
      %3117 = vst [vmem:[%s206 + $0x90] sm:$0xff] %v3084
      %3118 = vst [vmem:[%s206 + $0x98] sm:$0xff] %v3085
      %3119 = vst [vmem:[%s206 + $0xa0] sm:$0xff] %v3086
      %3120 = vst [vmem:[%s206 + $0xa8] sm:$0xff] %v3087
      %3121 = vst [vmem:[%s206 + $0xb0] sm:$0xff] %v3088
      %3122 = vst [vmem:[%s206 + $0xb8] sm:$0xff] %v3089
      %3123 = vst [vmem:[%s206 + $0xc0] sm:$0xff] %v3090
      %3124 = vst [vmem:[%s206 + $0xc8] sm:$0xff] %v3091
      %3125 = vst [vmem:[%s206 + $0xd0] sm:$0xff] %v3092
      %3126 = vst [vmem:[%s206 + $0xd8] sm:$0xff] %v3093
      %3127 = vst [vmem:[%s206 + $0xe0] sm:$0xff] %v3094
      %3128 = vst [vmem:[%s206 + $0xe8] sm:$0xff] %v3095
      %3129 = vst [vmem:[%s206 + $0xf0] sm:$0xff] %v3096
      %3130 = vst [vmem:[%s206 + $0xf8] sm:$0xff] %v3097
      %3131 = vst [vmem:[%s206 + $0x100] sm:$0xff] %v3098
      %s3132 = smul.u32 33, %s19
      %p3133 = scmp.lt.s32.totalorder %s18, 1
      %s3134 = scalar_select %p3133, %s18, 1
      %p3135 = scmp.lt.s32.totalorder %s3132, 32
      %s3136 = scalar_select %p3135, %s3132, 32
      %s3137 = smul.addr %s3134, 33
      %s3138 = sadd.s32 %s3136, %s3137
      %s3139 = smul.addr %s3138, 8
      %s3140 = scalar_lea.vmem %s3, %s3139
      // Predicated region
      $region33: #{conv_relu_forward.1} parent=31 // pred_check
        %p3141 = pneg %p116
      $region34: #{conv_relu_forward.1} parent=31 // pred_check_branch
        %3143 = sbr.rel (%p3141) target = $region36
      $region35: #{conv_relu_forward.1} parent=31 // pred_region
        %s3144 = smul.u32 33, %s19
      $region36: #{conv_relu_forward.1} parent=31 // pred_fallthru
        _
    $region32: #{conv_relu_forward.1} parent=5 // pred_fallthru
      _
    %p3145 = scmp.le.s32.totalorder 2, %s9
    // Predicated region
    $region37: #{conv_relu_forward.1} parent=5 // pred_check
      %p3146 = pneg %p3145
    $region38: #{conv_relu_forward.1} parent=5 // pred_check_branch
      %3148 = sbr.rel (%p3146) target = $region40
    $region39: #{conv_relu_forward.1} parent=5 // pred_region
      %s3149 = ssub.s32 %s9, 2
      // Predicated region
      $region41: #{conv_relu_forward.1} parent=39 // pred_check
        %p3150 = pneg %p122
      $region42: #{conv_relu_forward.1} parent=39 // pred_check_branch
        %3152 = sbr.rel (%p3150) target = $region44
      $region43: #{conv_relu_forward.1} parent=39 // pred_region
        %s3153 = smul.u32 33, %s21
        %p3154 = scmp.lt.s32.totalorder %s20, 1
        %s3155 = scalar_select %p3154, %s20, 1
        %p3156 = scmp.lt.s32.totalorder %s3153, 32
        %s3157 = scalar_select %p3156, %s3153, 32
        %s3158 = smul.addr %s3155, 33
        %s3159 = sadd.s32 %s3157, %s3158
        %s3160 = smul.addr %s3159, 8
        %s3161 = scalar_lea.vmem %s3, %s3160
      $region44: #{conv_relu_forward.1} parent=39 // pred_fallthru
        _
    $region40: #{conv_relu_forward.1} parent=5 // pred_fallthru
      _
  $region6: #{conv_relu_forward.1} parent=0 // loop_footer
    %s13 = sadd.s32 1, %s9
  $region7: #{conv_relu_forward.1} parent=0 // loop_footer_branch
    %8 = sbr.rel target = $region3
  $region8: #{conv_relu_forward.1} parent=0 // loop_exit
    _

</llo_original>
